<compile_context>
chip_gen: v7x
topology: tpu7x:2x2x1
jax: 0.10.0
libtpu: 0.0.40
codegen_flags: <defaults>
</compile_context>

<pallas_src>
import functools

import jax
import jax.numpy as jnp
from jax.experimental import pallas as pl
from jax.experimental.pallas import tpu as pltpu

INPUT_SIZE = 28
HIDDEN = 64
NUM_CLASSES = 10
CLASSES_PAD = 128    # lane-dense output store, sliced back to 10 in wrapper


def _lstm_linear_kernel(x_ref, w_ih_ref, w_hh_ref, b_ref, w_out_ref, b_out_ref,
                        out_ref, gx_ref, *, T, Bp, H):
    """Full LSTM time loop + final Linear in a single kernel invocation.

    x_ref     : (T*Bp, I)      time-major inputs, batch padded, flattened
    w_ih_ref  : (I, 4*H)       input->gates weights, gate order [i, f, o, g]
    w_hh_ref  : (H, 4*H)       hidden->gates weights, same order
    b_ref     : (1, 4*H)       combined bias (b_ih + b_hh)
    w_out_ref : (H, Cp)        linear weights, padded cols 0
    b_out_ref : (1, Cp)        linear bias, padded lanes 0
    out_ref   : (Bp, Cp)       logits for the last time step (padded)
    gx_ref    : (T*Bp, 4*H)    VMEM scratch: precomputed input-side gates
    """
    # --- Hoisted input projection for all timesteps (bias folded in). ------
    gx_ref[...] = (jnp.dot(x_ref[...], w_ih_ref[...],
                           preferred_element_type=jnp.float32)
                   + b_ref[...])

    w_hh = w_hh_ref[...]                              # resident across steps

    h0 = jnp.zeros((Bp, H), jnp.float32)
    c0 = jnp.zeros((Bp, H), jnp.float32)

    def step(t, carry):
        h, c = carry
        row = pl.multiple_of(t * Bp, Bp)
        # (Bp, 4*H): precomputed input gates + recurrent contribution.
        gates = gx_ref[pl.ds(row, Bp), :] + jnp.dot(
            h, w_hh, preferred_element_type=jnp.float32)
        # Gate order [i, f, o, g]: one wide sigmoid (3*H lanes) + one tanh.
        ifo = jax.nn.sigmoid(gates[:, :3 * H])
        g_g = jnp.tanh(gates[:, 3 * H:])
        i_g = ifo[:, 0 * H:1 * H]
        f_g = ifo[:, 1 * H:2 * H]
        o_g = ifo[:, 2 * H:3 * H]
        c_new = f_g * c + i_g * g_g
        h_new = o_g * jnp.tanh(c_new)
        return (h_new, c_new)

    # T is small and static -> fully unroll so the scheduler sees all steps.
    h_last, _ = jax.lax.fori_loop(0, T, step, (h0, c0), unroll=True)

    # Final Linear, lane-dense (Bp, 128) store.
    out_ref[...] = (jnp.dot(h_last, w_out_ref[...],
                            preferred_element_type=jnp.float32)
                    + b_out_ref[...])


def prepare_params(w_ih, w_hh, b_ih, b_hh, w_out, b_out):
    """One-time ("model init") weight preparation, hoisted out of the
    per-call path: transpose, reorder gates [i,f,g,o] -> [i,f,o,g], pad the
    Linear to 128 output lanes."""
    H, C, Cp = HIDDEN, NUM_CLASSES, CLASSES_PAD

    def reorder(g):
        # (K, 4H) in PyTorch gate order [i, f, g, o] -> [i, f, o, g].
        return jnp.concatenate([g[:, 0 * H:1 * H],   # i
                                g[:, 1 * H:2 * H],   # f
                                g[:, 3 * H:4 * H],   # o
                                g[:, 2 * H:3 * H]],  # g
                               axis=1)

    w_ih_p = reorder(jnp.transpose(w_ih).astype(jnp.float32))        # (I, 4H)
    w_hh_p = reorder(jnp.transpose(w_hh).astype(jnp.float32))        # (H, 4H)
    bias_p = reorder((b_ih + b_hh).astype(jnp.float32)[None, :])     # (1, 4H)
    w_out_p = jnp.pad(jnp.transpose(w_out).astype(jnp.float32),
                      ((0, 0), (0, Cp - C)))                         # (H, Cp)
    b_out_p = jnp.pad(b_out.astype(jnp.float32)[None, :],
                      ((0, 0), (0, Cp - C)))                         # (1, Cp)
    return w_ih_p, w_hh_p, bias_p, w_out_p, b_out_p


@jax.jit
def rnn_forward_prepared(x, w_ih_p, w_hh_p, bias_p, w_out_p, b_out_p):
    """x: (B, T, I) float32 (batch-first, like the PyTorch module).
    Weights must come from prepare_params()."""
    B, T, I = x.shape
    H = HIDDEN
    C, Cp = NUM_CLASSES, CLASSES_PAD
    Bp = max(8, ((B + 7) // 8) * 8)          # pad batch to a full sublane

    x = x.astype(jnp.float32)
    x_tbi = jnp.transpose(x, (1, 0, 2))                       # (T, B, I)
    x_tbi = jnp.pad(x_tbi, ((0, 0), (0, Bp - B), (0, 0)))     # (T, Bp, I)
    x_2d = x_tbi.reshape(T * Bp, I)                           # (T*Bp, I)

    kernel = functools.partial(_lstm_linear_kernel, T=T, Bp=Bp, H=H)

    flops = (2 * T * Bp * I * 4 * H           # hoisted input projection
             + 2 * T * Bp * H * 4 * H         # recurrent matmuls
             + 2 * Bp * H * Cp)               # final linear
    transcendentals = T * Bp * (4 * H + H)    # gate sigmoid/tanh + tanh(c)
    bytes_accessed = 4 * (x_2d.size + w_ih_p.size + w_hh_p.size + bias_p.size
                          + w_out_p.size + b_out_p.size + Bp * Cp)

    # Single kernel invocation: no grid, no per-input double buffering.
    out_padded = pl.pallas_call(
        kernel,
        out_shape=jax.ShapeDtypeStruct((Bp, Cp), jnp.float32),
        scratch_shapes=[pltpu.VMEM((T * Bp, 4 * H), jnp.float32)],
        compiler_params=pltpu.CompilerParams(
            vmem_limit_bytes=32 * 1024 * 1024),
        cost_estimate=pl.CostEstimate(flops=flops,
                                      transcendentals=transcendentals,
                                      bytes_accessed=bytes_accessed),
    )(x_2d, w_ih_p, w_hh_p, bias_p, w_out_p, b_out_p)

    return out_padded[:B, :C]


def rnn_forward(x, w_ih, w_hh, b_ih, b_hh, w_out, b_out):
    """Convenience entry taking raw PyTorch-layout parameters."""
    params = prepare_params(w_ih, w_hh, b_ih, b_hh, w_out, b_out)
    return rnn_forward_prepared(x, *params)


def _reference_forward(x, w_ih, w_hh, b_ih, b_hh, w_out, b_out):
    """Pure-JAX reference matching torch.nn.LSTM + Linear semantics."""
    B, T, I = x.shape
    H = HIDDEN
    h = jnp.zeros((B, H), jnp.float32)
    c = jnp.zeros((B, H), jnp.float32)
    for t in range(T):
        gates = x[:, t, :] @ w_ih.T + b_ih + h @ w_hh.T + b_hh
        i_g = jax.nn.sigmoid(gates[:, 0 * H:1 * H])
        f_g = jax.nn.sigmoid(gates[:, 1 * H:2 * H])
        g_g = jnp.tanh(gates[:, 2 * H:3 * H])
        o_g = jax.nn.sigmoid(gates[:, 3 * H:4 * H])
        c = f_g * c + i_g * g_g
        h = o_g * jnp.tanh(c)
    return h @ w_out.T + b_out


if __name__ == "__main__":
    B, T, I, H, C = 2, 8, INPUT_SIZE, HIDDEN, NUM_CLASSES

    key = jax.random.PRNGKey(0)
    keys = jax.random.split(key, 8)
    bound = 1.0 / jnp.sqrt(float(H))  # PyTorch default init bound

    # Parameter shapes follow torch: weight_ih_l0 (4H, I), weight_hh_l0 (4H, H),
    # bias_ih_l0 (4H,), bias_hh_l0 (4H,), out.weight (C, H), out.bias (C,)
    w_ih = jax.random.uniform(keys[0], (4 * H, I), jnp.float32, -bound, bound)
    w_hh = jax.random.uniform(keys[1], (4 * H, H), jnp.float32, -bound, bound)
    b_ih = jax.random.uniform(keys[2], (4 * H,), jnp.float32, -bound, bound)
    b_hh = jax.random.uniform(keys[3], (4 * H,), jnp.float32, -bound, bound)
    w_out = jax.random.uniform(keys[4], (C, H), jnp.float32, -bound, bound)
    b_out = jax.random.uniform(keys[5], (C,), jnp.float32, -bound, bound)

    x = jax.random.normal(keys[6], (B, T, I), jnp.float32)

    # Weight prep happens once, outside the per-call jit path.
    params = prepare_params(w_ih, w_hh, b_ih, b_hh, w_out, b_out)
    params = jax.block_until_ready(params)

    out = rnn_forward_prepared(x, *params)
    out = jax.block_until_ready(out)

    ref = _reference_forward(x, w_ih, w_hh, b_ih, b_hh, w_out, b_out)
    assert out.shape == (B, C), out.shape
    assert jnp.allclose(out, ref, atol=1e-4, rtol=1e-4), (
        f"max abs err = {jnp.max(jnp.abs(out - ref))}")

    print("KERNEL_OK")
</pallas_src>

<mosaic_0001>
module attributes {stable_mosaic.version = 11 : i64} {
  func.func @_lstm_linear_kernel(%arg0: memref<64x28xf32, #tpu.memory_space<vmem>>, %arg1: memref<28x256xf32, #tpu.memory_space<vmem>>, %arg2: memref<64x256xf32, #tpu.memory_space<vmem>>, %arg3: memref<1x256xf32, #tpu.memory_space<vmem>>, %arg4: memref<64x128xf32, #tpu.memory_space<vmem>>, %arg5: memref<1x128xf32, #tpu.memory_space<vmem>>, %arg6: memref<8x128xf32, #tpu.memory_space<vmem>>, %arg7: memref<64x256xf32, #tpu.memory_space<vmem>>) attributes {dimension_semantics = [], scalar_prefetch = 0 : i64, scratch_operands = 1 : i64, tpu.core_type = #tpu.core_type<tc>} {
    %c0 = arith.constant 0 : index
    %c0_0 = arith.constant 0 : index
    %0 = vector.load %arg0[%c0, %c0_0] : memref<64x28xf32, #tpu.memory_space<vmem>>, vector<64x28xf32>
    %c0_1 = arith.constant 0 : index
    %c0_2 = arith.constant 0 : index
    %1 = vector.load %arg1[%c0_1, %c0_2] : memref<28x256xf32, #tpu.memory_space<vmem>>, vector<28x256xf32>
    %cst = arith.constant dense<0.000000e+00> : vector<64x256xf32>
    %2 = tpu.matmul %0, %1, %cst {dimension_numbers = #tpu.dot_dimension_numbers<[1], [0], [0], [1], [0, 0, 1, 1], [], []>} : vector<64x28xf32>, vector<28x256xf32>, vector<64x256xf32> -> vector<64x256xf32>
    %c0_3 = arith.constant 0 : index
    %c0_4 = arith.constant 0 : index
    %3 = vector.load %arg3[%c0_3, %c0_4] : memref<1x256xf32, #tpu.memory_space<vmem>>, vector<1x256xf32>
    %4 = vector.broadcast %3 : vector<1x256xf32> to vector<64x256xf32>
    %5 = arith.addf %2, %4 : vector<64x256xf32>
    %c0_5 = arith.constant 0 : index
    %c0_6 = arith.constant 0 : index
    %6 = vector.load %arg7[%c0_5, %c0_6] : memref<64x256xf32, #tpu.memory_space<vmem>>, vector<64x256xf32>
    tpu.vector_store %arg7[%c0_5, %c0_6], %5 {strides = array<i32>} : memref<64x256xf32, #tpu.memory_space<vmem>>, vector<64x256xf32>,
    %c0_7 = arith.constant 0 : index
    %c0_8 = arith.constant 0 : index
    %7 = vector.load %arg2[%c0_7, %c0_8] : memref<64x256xf32, #tpu.memory_space<vmem>>, vector<64x256xf32>
    %cst_9 = arith.constant 0.000000e+00 : f32
    %8 = vector.broadcast %cst_9 : f32 to vector<8x64xf32>
    %cst_10 = arith.constant 0.000000e+00 : f32
    %9 = vector.broadcast %cst_10 : f32 to vector<8x64xf32>
    %c0_i32 = arith.constant 0 : i32
    %c8_i32 = arith.constant 8 : i32
    %10 = arith.muli %c0_i32, %c8_i32 : i32
    %11 = tpu.assume_multiple %10, 8 : i32
    %12 = arith.index_cast %11 : i32 to index
    %c0_11 = arith.constant 0 : index
    %13 = vector.load %arg7[%12, %c0_11] : memref<64x256xf32, #tpu.memory_space<vmem>>, vector<8x256xf32>
    %cst_12 = arith.constant dense<0.000000e+00> : vector<8x256xf32>
    %14 = tpu.matmul %8, %7, %cst_12 {dimension_numbers = #tpu.dot_dimension_numbers<[1], [0], [0], [1], [0, 0, 1, 1], [], []>} : vector<8x64xf32>, vector<64x256xf32>, vector<8x256xf32> -> vector<8x256xf32>
    %15 = arith.addf %13, %14 : vector<8x256xf32>
    %16 = vector.extract_strided_slice %15 {offsets = [0, 0], sizes = [8, 192], strides = [1, 1]} : vector<8x256xf32> to vector<8x192xf32>
    %17 = arith.negf %16 : vector<8x192xf32>
    %18 = math.exp %17 : vector<8x192xf32>
    %cst_13 = arith.constant 1.000000e+00 : f32
    %19 = vector.broadcast %cst_13 : f32 to vector<8x192xf32>
    %20 = arith.addf %19, %18 : vector<8x192xf32>
    %21 = arith.divf %19, %20 : vector<8x192xf32>
    %22 = vector.extract_strided_slice %15 {offsets = [0, 192], sizes = [8, 64], strides = [1, 1]} : vector<8x256xf32> to vector<8x64xf32>
    %23 = math.tanh %22 : vector<8x64xf32>
    %24 = vector.extract_strided_slice %21 {offsets = [0, 0], sizes = [8, 64], strides = [1, 1]} : vector<8x192xf32> to vector<8x64xf32>
    %25 = vector.extract_strided_slice %21 {offsets = [0, 64], sizes = [8, 64], strides = [1, 1]} : vector<8x192xf32> to vector<8x64xf32>
    %26 = vector.extract_strided_slice %21 {offsets = [0, 128], sizes = [8, 64], strides = [1, 1]} : vector<8x192xf32> to vector<8x64xf32>
    %27 = arith.mulf %25, %9 : vector<8x64xf32>
    %28 = arith.mulf %24, %23 : vector<8x64xf32>
    %29 = arith.addf %27, %28 : vector<8x64xf32>
    %30 = math.tanh %29 : vector<8x64xf32>
    %31 = arith.mulf %26, %30 : vector<8x64xf32>
    %c1_i32 = arith.constant 1 : i32
    %c8_i32_14 = arith.constant 8 : i32
    %32 = arith.muli %c1_i32, %c8_i32_14 : i32
    %33 = tpu.assume_multiple %32, 8 : i32
    %34 = arith.index_cast %33 : i32 to index
    %c0_15 = arith.constant 0 : index
    %35 = vector.load %arg7[%34, %c0_15] : memref<64x256xf32, #tpu.memory_space<vmem>>, vector<8x256xf32>
    %cst_16 = arith.constant dense<0.000000e+00> : vector<8x256xf32>
    %36 = tpu.matmul %31, %7, %cst_16 {dimension_numbers = #tpu.dot_dimension_numbers<[1], [0], [0], [1], [0, 0, 1, 1], [], []>} : vector<8x64xf32>, vector<64x256xf32>, vector<8x256xf32> -> vector<8x256xf32>
    %37 = arith.addf %35, %36 : vector<8x256xf32>
    %38 = vector.extract_strided_slice %37 {offsets = [0, 0], sizes = [8, 192], strides = [1, 1]} : vector<8x256xf32> to vector<8x192xf32>
    %39 = arith.negf %38 : vector<8x192xf32>
    %40 = math.exp %39 : vector<8x192xf32>
    %cst_17 = arith.constant 1.000000e+00 : f32
    %41 = vector.broadcast %cst_17 : f32 to vector<8x192xf32>
    %42 = arith.addf %41, %40 : vector<8x192xf32>
    %43 = arith.divf %41, %42 : vector<8x192xf32>
    %44 = vector.extract_strided_slice %37 {offsets = [0, 192], sizes = [8, 64], strides = [1, 1]} : vector<8x256xf32> to vector<8x64xf32>
    %45 = math.tanh %44 : vector<8x64xf32>
    %46 = vector.extract_strided_slice %43 {offsets = [0, 0], sizes = [8, 64], strides = [1, 1]} : vector<8x192xf32> to vector<8x64xf32>
    %47 = vector.extract_strided_slice %43 {offsets = [0, 64], sizes = [8, 64], strides = [1, 1]} : vector<8x192xf32> to vector<8x64xf32>
    %48 = vector.extract_strided_slice %43 {offsets = [0, 128], sizes = [8, 64], strides = [1, 1]} : vector<8x192xf32> to vector<8x64xf32>
    %49 = arith.mulf %47, %29 : vector<8x64xf32>
    %50 = arith.mulf %46, %45 : vector<8x64xf32>
    %51 = arith.addf %49, %50 : vector<8x64xf32>
    %52 = math.tanh %51 : vector<8x64xf32>
    %53 = arith.mulf %48, %52 : vector<8x64xf32>
    %c2_i32 = arith.constant 2 : i32
    %c8_i32_18 = arith.constant 8 : i32
    %54 = arith.muli %c2_i32, %c8_i32_18 : i32
    %55 = tpu.assume_multiple %54, 8 : i32
    %56 = arith.index_cast %55 : i32 to index
    %c0_19 = arith.constant 0 : index
    %57 = vector.load %arg7[%56, %c0_19] : memref<64x256xf32, #tpu.memory_space<vmem>>, vector<8x256xf32>
    %cst_20 = arith.constant dense<0.000000e+00> : vector<8x256xf32>
    %58 = tpu.matmul %53, %7, %cst_20 {dimension_numbers = #tpu.dot_dimension_numbers<[1], [0], [0], [1], [0, 0, 1, 1], [], []>} : vector<8x64xf32>, vector<64x256xf32>, vector<8x256xf32> -> vector<8x256xf32>
    %59 = arith.addf %57, %58 : vector<8x256xf32>
    %60 = vector.extract_strided_slice %59 {offsets = [0, 0], sizes = [8, 192], strides = [1, 1]} : vector<8x256xf32> to vector<8x192xf32>
    %61 = arith.negf %60 : vector<8x192xf32>
    %62 = math.exp %61 : vector<8x192xf32>
    %cst_21 = arith.constant 1.000000e+00 : f32
    %63 = vector.broadcast %cst_21 : f32 to vector<8x192xf32>
    %64 = arith.addf %63, %62 : vector<8x192xf32>
    %65 = arith.divf %63, %64 : vector<8x192xf32>
    %66 = vector.extract_strided_slice %59 {offsets = [0, 192], sizes = [8, 64], strides = [1, 1]} : vector<8x256xf32> to vector<8x64xf32>
    %67 = math.tanh %66 : vector<8x64xf32>
    %68 = vector.extract_strided_slice %65 {offsets = [0, 0], sizes = [8, 64], strides = [1, 1]} : vector<8x192xf32> to vector<8x64xf32>
    %69 = vector.extract_strided_slice %65 {offsets = [0, 64], sizes = [8, 64], strides = [1, 1]} : vector<8x192xf32> to vector<8x64xf32>
    %70 = vector.extract_strided_slice %65 {offsets = [0, 128], sizes = [8, 64], strides = [1, 1]} : vector<8x192xf32> to vector<8x64xf32>
    %71 = arith.mulf %69, %51 : vector<8x64xf32>
    %72 = arith.mulf %68, %67 : vector<8x64xf32>
    %73 = arith.addf %71, %72 : vector<8x64xf32>
    %74 = math.tanh %73 : vector<8x64xf32>
    %75 = arith.mulf %70, %74 : vector<8x64xf32>
    %c3_i32 = arith.constant 3 : i32
    %c8_i32_22 = arith.constant 8 : i32
    %76 = arith.muli %c3_i32, %c8_i32_22 : i32
    %77 = tpu.assume_multiple %76, 8 : i32
    %78 = arith.index_cast %77 : i32 to index
    %c0_23 = arith.constant 0 : index
    %79 = vector.load %arg7[%78, %c0_23] : memref<64x256xf32, #tpu.memory_space<vmem>>, vector<8x256xf32>
    %cst_24 = arith.constant dense<0.000000e+00> : vector<8x256xf32>
    %80 = tpu.matmul %75, %7, %cst_24 {dimension_numbers = #tpu.dot_dimension_numbers<[1], [0], [0], [1], [0, 0, 1, 1], [], []>} : vector<8x64xf32>, vector<64x256xf32>, vector<8x256xf32> -> vector<8x256xf32>
    %81 = arith.addf %79, %80 : vector<8x256xf32>
    %82 = vector.extract_strided_slice %81 {offsets = [0, 0], sizes = [8, 192], strides = [1, 1]} : vector<8x256xf32> to vector<8x192xf32>
    %83 = arith.negf %82 : vector<8x192xf32>
    %84 = math.exp %83 : vector<8x192xf32>
    %cst_25 = arith.constant 1.000000e+00 : f32
    %85 = vector.broadcast %cst_25 : f32 to vector<8x192xf32>
    %86 = arith.addf %85, %84 : vector<8x192xf32>
    %87 = arith.divf %85, %86 : vector<8x192xf32>
    %88 = vector.extract_strided_slice %81 {offsets = [0, 192], sizes = [8, 64], strides = [1, 1]} : vector<8x256xf32> to vector<8x64xf32>
    %89 = math.tanh %88 : vector<8x64xf32>
    %90 = vector.extract_strided_slice %87 {offsets = [0, 0], sizes = [8, 64], strides = [1, 1]} : vector<8x192xf32> to vector<8x64xf32>
    %91 = vector.extract_strided_slice %87 {offsets = [0, 64], sizes = [8, 64], strides = [1, 1]} : vector<8x192xf32> to vector<8x64xf32>
    %92 = vector.extract_strided_slice %87 {offsets = [0, 128], sizes = [8, 64], strides = [1, 1]} : vector<8x192xf32> to vector<8x64xf32>
    %93 = arith.mulf %91, %73 : vector<8x64xf32>
    %94 = arith.mulf %90, %89 : vector<8x64xf32>
    %95 = arith.addf %93, %94 : vector<8x64xf32>
    %96 = math.tanh %95 : vector<8x64xf32>
    %97 = arith.mulf %92, %96 : vector<8x64xf32>
    %c4_i32 = arith.constant 4 : i32
    %c8_i32_26 = arith.constant 8 : i32
    %98 = arith.muli %c4_i32, %c8_i32_26 : i32
    %99 = tpu.assume_multiple %98, 8 : i32
    %100 = arith.index_cast %99 : i32 to index
    %c0_27 = arith.constant 0 : index
    %101 = vector.load %arg7[%100, %c0_27] : memref<64x256xf32, #tpu.memory_space<vmem>>, vector<8x256xf32>
    %cst_28 = arith.constant dense<0.000000e+00> : vector<8x256xf32>
    %102 = tpu.matmul %97, %7, %cst_28 {dimension_numbers = #tpu.dot_dimension_numbers<[1], [0], [0], [1], [0, 0, 1, 1], [], []>} : vector<8x64xf32>, vector<64x256xf32>, vector<8x256xf32> -> vector<8x256xf32>
    %103 = arith.addf %101, %102 : vector<8x256xf32>
    %104 = vector.extract_strided_slice %103 {offsets = [0, 0], sizes = [8, 192], strides = [1, 1]} : vector<8x256xf32> to vector<8x192xf32>
    %105 = arith.negf %104 : vector<8x192xf32>
    %106 = math.exp %105 : vector<8x192xf32>
    %cst_29 = arith.constant 1.000000e+00 : f32
    %107 = vector.broadcast %cst_29 : f32 to vector<8x192xf32>
    %108 = arith.addf %107, %106 : vector<8x192xf32>
    %109 = arith.divf %107, %108 : vector<8x192xf32>
    %110 = vector.extract_strided_slice %103 {offsets = [0, 192], sizes = [8, 64], strides = [1, 1]} : vector<8x256xf32> to vector<8x64xf32>
    %111 = math.tanh %110 : vector<8x64xf32>
    %112 = vector.extract_strided_slice %109 {offsets = [0, 0], sizes = [8, 64], strides = [1, 1]} : vector<8x192xf32> to vector<8x64xf32>
    %113 = vector.extract_strided_slice %109 {offsets = [0, 64], sizes = [8, 64], strides = [1, 1]} : vector<8x192xf32> to vector<8x64xf32>
    %114 = vector.extract_strided_slice %109 {offsets = [0, 128], sizes = [8, 64], strides = [1, 1]} : vector<8x192xf32> to vector<8x64xf32>
    %115 = arith.mulf %113, %95 : vector<8x64xf32>
    %116 = arith.mulf %112, %111 : vector<8x64xf32>
    %117 = arith.addf %115, %116 : vector<8x64xf32>
    %118 = math.tanh %117 : vector<8x64xf32>
    %119 = arith.mulf %114, %118 : vector<8x64xf32>
    %c5_i32 = arith.constant 5 : i32
    %c8_i32_30 = arith.constant 8 : i32
    %120 = arith.muli %c5_i32, %c8_i32_30 : i32
    %121 = tpu.assume_multiple %120, 8 : i32
    %122 = arith.index_cast %121 : i32 to index
    %c0_31 = arith.constant 0 : index
    %123 = vector.load %arg7[%122, %c0_31] : memref<64x256xf32, #tpu.memory_space<vmem>>, vector<8x256xf32>
    %cst_32 = arith.constant dense<0.000000e+00> : vector<8x256xf32>
    %124 = tpu.matmul %119, %7, %cst_32 {dimension_numbers = #tpu.dot_dimension_numbers<[1], [0], [0], [1], [0, 0, 1, 1], [], []>} : vector<8x64xf32>, vector<64x256xf32>, vector<8x256xf32> -> vector<8x256xf32>
    %125 = arith.addf %123, %124 : vector<8x256xf32>
    %126 = vector.extract_strided_slice %125 {offsets = [0, 0], sizes = [8, 192], strides = [1, 1]} : vector<8x256xf32> to vector<8x192xf32>
    %127 = arith.negf %126 : vector<8x192xf32>
    %128 = math.exp %127 : vector<8x192xf32>
    %cst_33 = arith.constant 1.000000e+00 : f32
    %129 = vector.broadcast %cst_33 : f32 to vector<8x192xf32>
    %130 = arith.addf %129, %128 : vector<8x192xf32>
    %131 = arith.divf %129, %130 : vector<8x192xf32>
    %132 = vector.extract_strided_slice %125 {offsets = [0, 192], sizes = [8, 64], strides = [1, 1]} : vector<8x256xf32> to vector<8x64xf32>
    %133 = math.tanh %132 : vector<8x64xf32>
    %134 = vector.extract_strided_slice %131 {offsets = [0, 0], sizes = [8, 64], strides = [1, 1]} : vector<8x192xf32> to vector<8x64xf32>
    %135 = vector.extract_strided_slice %131 {offsets = [0, 64], sizes = [8, 64], strides = [1, 1]} : vector<8x192xf32> to vector<8x64xf32>
    %136 = vector.extract_strided_slice %131 {offsets = [0, 128], sizes = [8, 64], strides = [1, 1]} : vector<8x192xf32> to vector<8x64xf32>
    %137 = arith.mulf %135, %117 : vector<8x64xf32>
    %138 = arith.mulf %134, %133 : vector<8x64xf32>
    %139 = arith.addf %137, %138 : vector<8x64xf32>
    %140 = math.tanh %139 : vector<8x64xf32>
    %141 = arith.mulf %136, %140 : vector<8x64xf32>
    %c6_i32 = arith.constant 6 : i32
    %c8_i32_34 = arith.constant 8 : i32
    %142 = arith.muli %c6_i32, %c8_i32_34 : i32
    %143 = tpu.assume_multiple %142, 8 : i32
    %144 = arith.index_cast %143 : i32 to index
    %c0_35 = arith.constant 0 : index
    %145 = vector.load %arg7[%144, %c0_35] : memref<64x256xf32, #tpu.memory_space<vmem>>, vector<8x256xf32>
    %cst_36 = arith.constant dense<0.000000e+00> : vector<8x256xf32>
    %146 = tpu.matmul %141, %7, %cst_36 {dimension_numbers = #tpu.dot_dimension_numbers<[1], [0], [0], [1], [0, 0, 1, 1], [], []>} : vector<8x64xf32>, vector<64x256xf32>, vector<8x256xf32> -> vector<8x256xf32>
    %147 = arith.addf %145, %146 : vector<8x256xf32>
    %148 = vector.extract_strided_slice %147 {offsets = [0, 0], sizes = [8, 192], strides = [1, 1]} : vector<8x256xf32> to vector<8x192xf32>
    %149 = arith.negf %148 : vector<8x192xf32>
    %150 = math.exp %149 : vector<8x192xf32>
    %cst_37 = arith.constant 1.000000e+00 : f32
    %151 = vector.broadcast %cst_37 : f32 to vector<8x192xf32>
    %152 = arith.addf %151, %150 : vector<8x192xf32>
    %153 = arith.divf %151, %152 : vector<8x192xf32>
    %154 = vector.extract_strided_slice %147 {offsets = [0, 192], sizes = [8, 64], strides = [1, 1]} : vector<8x256xf32> to vector<8x64xf32>
    %155 = math.tanh %154 : vector<8x64xf32>
    %156 = vector.extract_strided_slice %153 {offsets = [0, 0], sizes = [8, 64], strides = [1, 1]} : vector<8x192xf32> to vector<8x64xf32>
    %157 = vector.extract_strided_slice %153 {offsets = [0, 64], sizes = [8, 64], strides = [1, 1]} : vector<8x192xf32> to vector<8x64xf32>
    %158 = vector.extract_strided_slice %153 {offsets = [0, 128], sizes = [8, 64], strides = [1, 1]} : vector<8x192xf32> to vector<8x64xf32>
    %159 = arith.mulf %157, %139 : vector<8x64xf32>
    %160 = arith.mulf %156, %155 : vector<8x64xf32>
    %161 = arith.addf %159, %160 : vector<8x64xf32>
    %162 = math.tanh %161 : vector<8x64xf32>
    %163 = arith.mulf %158, %162 : vector<8x64xf32>
    %c7_i32 = arith.constant 7 : i32
    %c8_i32_38 = arith.constant 8 : i32
    %164 = arith.muli %c7_i32, %c8_i32_38 : i32
    %165 = tpu.assume_multiple %164, 8 : i32
    %166 = arith.index_cast %165 : i32 to index
    %c0_39 = arith.constant 0 : index
    %167 = vector.load %arg7[%166, %c0_39] : memref<64x256xf32, #tpu.memory_space<vmem>>, vector<8x256xf32>
    %cst_40 = arith.constant dense<0.000000e+00> : vector<8x256xf32>
    %168 = tpu.matmul %163, %7, %cst_40 {dimension_numbers = #tpu.dot_dimension_numbers<[1], [0], [0], [1], [0, 0, 1, 1], [], []>} : vector<8x64xf32>, vector<64x256xf32>, vector<8x256xf32> -> vector<8x256xf32>
    %169 = arith.addf %167, %168 : vector<8x256xf32>
    %170 = vector.extract_strided_slice %169 {offsets = [0, 0], sizes = [8, 192], strides = [1, 1]} : vector<8x256xf32> to vector<8x192xf32>
    %171 = arith.negf %170 : vector<8x192xf32>
    %172 = math.exp %171 : vector<8x192xf32>
    %cst_41 = arith.constant 1.000000e+00 : f32
    %173 = vector.broadcast %cst_41 : f32 to vector<8x192xf32>
    %174 = arith.addf %173, %172 : vector<8x192xf32>
    %175 = arith.divf %173, %174 : vector<8x192xf32>
    %176 = vector.extract_strided_slice %169 {offsets = [0, 192], sizes = [8, 64], strides = [1, 1]} : vector<8x256xf32> to vector<8x64xf32>
    %177 = math.tanh %176 : vector<8x64xf32>
    %178 = vector.extract_strided_slice %175 {offsets = [0, 0], sizes = [8, 64], strides = [1, 1]} : vector<8x192xf32> to vector<8x64xf32>
    %179 = vector.extract_strided_slice %175 {offsets = [0, 64], sizes = [8, 64], strides = [1, 1]} : vector<8x192xf32> to vector<8x64xf32>
    %180 = vector.extract_strided_slice %175 {offsets = [0, 128], sizes = [8, 64], strides = [1, 1]} : vector<8x192xf32> to vector<8x64xf32>
    %181 = arith.mulf %179, %161 : vector<8x64xf32>
    %182 = arith.mulf %178, %177 : vector<8x64xf32>
    %183 = arith.addf %181, %182 : vector<8x64xf32>
    %184 = math.tanh %183 : vector<8x64xf32>
    %185 = arith.mulf %180, %184 : vector<8x64xf32>
    %c8_i32_42 = arith.constant 8 : i32
    %c0_43 = arith.constant 0 : index
    %c0_44 = arith.constant 0 : index
    %186 = vector.load %arg4[%c0_43, %c0_44] : memref<64x128xf32, #tpu.memory_space<vmem>>, vector<64x128xf32>
    %cst_45 = arith.constant dense<0.000000e+00> : vector<8x128xf32>
    %187 = tpu.matmul %185, %186, %cst_45 {dimension_numbers = #tpu.dot_dimension_numbers<[1], [0], [0], [1], [0, 0, 1, 1], [], []>} : vector<8x64xf32>, vector<64x128xf32>, vector<8x128xf32> -> vector<8x128xf32>
    %c0_46 = arith.constant 0 : index
    %c0_47 = arith.constant 0 : index
    %188 = vector.load %arg5[%c0_46, %c0_47] : memref<1x128xf32, #tpu.memory_space<vmem>>, vector<1x128xf32>
    %189 = vector.broadcast %188 : vector<1x128xf32> to vector<8x128xf32>
    %190 = arith.addf %187, %189 : vector<8x128xf32>
    %c0_48 = arith.constant 0 : index
    %c0_49 = arith.constant 0 : index
    %191 = vector.load %arg6[%c0_48, %c0_49] : memref<8x128xf32, #tpu.memory_space<vmem>>, vector<8x128xf32>
    tpu.vector_store %arg6[%c0_48, %c0_49], %190 {strides = array<i32>} : memref<8x128xf32, #tpu.memory_space<vmem>>, vector<8x128xf32>,
    return
  }
}

</mosaic_0001>

<llo_original>
// kernel: rnn_forward_prepared.1
$region0: #{rnn_forward_prepared.1}
  #allocation0 [shape = 'u32[]', space=smem, size = 0x4, offset = 0x4, fixed_abs, tag = 'smem constant byte address 0x4 - core index']
  #allocation1 [shape = 'u32[144,128]{1,0:T(1,128)}', space=vmem, size = 0x12000, scoped, tag = 'internal scratch']
  #allocation2 [shape = 'f32[64,256]{1,0:T(8,128)}', space=vmem, size = 0x10000, scoped, tag = 'scratch operand']
  %s0 = inlined_call_operand.vmem [shape: f32[64,28], index: 0, kind: input, shape index: {}]
  %s1 = inlined_call_operand.vmem [shape: f32[28,256], index: 1, kind: input, shape index: {}]
  %s2 = inlined_call_operand.hbm [shape: f32[64,256], index: 2, kind: input, shape index: {}]
  %s3 = inlined_call_operand.vmem [shape: f32[1,256], index: 3, kind: input, shape index: {}]
  %s4 = inlined_call_operand.vmem [shape: f32[64,128], index: 4, kind: input, shape index: {}]
  %s5 = inlined_call_operand.vmem [shape: f32[1,128], index: 5, kind: input, shape index: {}]
  %s6 = inlined_call_operand.vmem [shape: f32[8,128], index: 6, kind: output, shape index: {}]
  %s7 = sld [smem:[#allocation0]]
  $region38: #{rnn_forward_prepared.1} parent=0
    _
  %s9 = ssub.s32 1, %s7
  %s10 = scalar_select 0, %s9, %s7
  $region1: #{rnn_forward_prepared.1} parent=0
    #allocation3 [shape = 'u8[65536]{0}', space=vmem, size = 0x10000, scoped, tag = 'input window, operand 2, single buffered']
    #allocation4 [shape = 's32[1]{0}', space=sflag, size = 0x4, scoped, tag = 'scoped memory for rnn_forward_prepared.1']
    %11 = vsyncpa [#allocation4], 0
    // Predicated region
    $region2: #{rnn_forward_prepared.1} parent=1 // pred_check
      _
    $region3: #{rnn_forward_prepared.1} parent=1 // pred_check_branch
      %13 = sbr.rel (0) target = $region5
    $region4: #{rnn_forward_prepared.1} parent=1 // pred_region
      _
    $region5: #{rnn_forward_prepared.1} parent=1 // pred_fallthru
      _
    // Predicated region
    $region6: #{rnn_forward_prepared.1} parent=1 // pred_check
      _
    $region7: #{rnn_forward_prepared.1} parent=1 // pred_check_branch
      %15 = sbr.rel (0) target = $region9
    $region8: #{rnn_forward_prepared.1} parent=1 // pred_region
      _
    $region9: #{rnn_forward_prepared.1} parent=1 // pred_fallthru
      _
    // Predicated region
    $region10: #{rnn_forward_prepared.1} parent=1 // pred_check
      _
    $region11: #{rnn_forward_prepared.1} parent=1 // pred_check_branch
      %17 = sbr.rel (0) target = $region13
    $region12: #{rnn_forward_prepared.1} parent=1 // pred_region
      %s19 = ssub.s32 2048, 2048
      %20 = vsyncadd [#allocation4], %s19
      %s21 = sshll.u32 [#allocation3], 4
      %s22 = int_to_ptr.vmem [resolvable:$true] %s21
      %27 = dma.hbm_to_vmem [thread:$0]  %s2, 2048, %s22, [#allocation4], 256, 256, 16
    $region13: #{rnn_forward_prepared.1} parent=1 // pred_fallthru
      _
    // Predicated region
    $region14: #{rnn_forward_prepared.1} parent=1 // pred_check
      _
    $region15: #{rnn_forward_prepared.1} parent=1 // pred_check_branch
      %29 = sbr.rel (0) target = $region17
    $region16: #{rnn_forward_prepared.1} parent=1 // pred_region
      _
    $region17: #{rnn_forward_prepared.1} parent=1 // pred_fallthru
      _
    // Predicated region
    $region18: #{rnn_forward_prepared.1} parent=1 // pred_check
      _
    $region19: #{rnn_forward_prepared.1} parent=1 // pred_check_branch
      %31 = sbr.rel (0) target = $region21
    $region20: #{rnn_forward_prepared.1} parent=1 // pred_region
      _
    $region21: #{rnn_forward_prepared.1} parent=1 // pred_fallthru
      _
    // Predicated region
    $region22: #{rnn_forward_prepared.1} parent=1 // pred_check
      _
    $region23: #{rnn_forward_prepared.1} parent=1 // pred_check_branch
      %33 = sbr.rel (0) target = $region25
    $region24: #{rnn_forward_prepared.1} parent=1 // pred_region
      _
    $region25: #{rnn_forward_prepared.1} parent=1 // pred_fallthru
      _
    // Predicated region
    $region26: #{rnn_forward_prepared.1} parent=1 // pred_check
      _
    $region27: #{rnn_forward_prepared.1} parent=1 // pred_check_branch
      %35 = sbr.rel (0) target = $region29
    $region28: #{rnn_forward_prepared.1} parent=1 // pred_region
      %36 = dma.done [#allocation4], 2048
    $region29: #{rnn_forward_prepared.1} parent=1 // pred_fallthru
      _
    %v37 = vld [vmem:[%s0] sm:$0xff]
    %v38 = vld [vmem:[%s0 + $0x8] sm:$0xff]
    %v39 = vld [vmem:[%s0 + $0x10] sm:$0xff]
    %v40 = vld [vmem:[%s0 + $0x18] sm:$0xff]
    %v41 = vld [vmem:[%s0 + $0x20] sm:$0xff]
    %v42 = vld [vmem:[%s0 + $0x28] sm:$0xff]
    %v43 = vld [vmem:[%s0 + $0x30] sm:$0xff]
    %v44 = vld [vmem:[%s0 + $0x38] sm:$0xff]
    %v45 = vld [vmem:[%s1] sm:$0xff]
    %v46 = vld [vmem:[%s1 + $0x8] sm:$0xff]
    %v47 = vld [vmem:[%s1 + $0x10] sm:$0xff]
    %v48 = vld [vmem:[%s1 + $0x18] sm:$0xff]
    %v49 = vld [vmem:[%s1 + $0x20] sm:$0xff]
    %v50 = vld [vmem:[%s1 + $0x28] sm:$0xff]
    %v51 = vld [vmem:[%s1 + $0x30] sm:$0xf]
    %v52 = vld [vmem:[%s1 + $0x38] sm:$0xf]
    %v53 = vld [vmem:[%s3] sm:$0x3]
    %v55 = vlaneseq
    %v56 = vshrl.u32 %v55, 7
    %v57 = vsub.s32 0, %v56
    %v58 = vrot.slane %v53, %v57
    %v59 = vlaneseq
    %v60 = vshrl.u32 %v59, 7
    %v61 = vsub.s32 1, %v60
    %v62 = vrot.slane %v53, %v61
    %vm65 = vcmask 228352
    %v67 = vsel %vm65, %v37, 0
    %v70 = vsel %vm65, %v38, 0
    %v73 = vsel %vm65, %v39, 0
    %v76 = vsel %vm65, %v40, 0
    %v79 = vsel %vm65, %v41, 0
    %v82 = vsel %vm65, %v42, 0
    %v85 = vsel %vm65, %v43, 0
    %v88 = vsel %vm65, %v44, 0
    %vm90 = vcmask 1043456
    %v92 = vsel %vm90, %v51, 0
    %v95 = vsel %vm90, %v52, 0
    %97 = vmatprep.subr.mxu0 %v46
    %98 = vmatpush1.msra.mxu0 %v45
    %99 = vmatprep.subr.mxu0 %v48
    %100 = vmatpush1.msra.mxu0 %v47
    %101 = vmatprep.subr.mxu0 %v50
    %102 = vmatpush1.msra.mxu0 %v49
    %103 = vmatprep.subr.mxu0 %v95
    %104 = vmatpush1.msra.mxu0 %v92
    %105 = vmatprep.subr.mxu0 0.0
    %106 = vmatpush1.msra.mxu0 0.0
    %107 = vmatprep.subr.mxu0 0.0
    %108 = vmatpush1.msra.mxu0 0.0
    %109 = vmatprep.subr.mxu0 0.0
    %110 = vmatpush1.msra.mxu0 0.0
    %111 = vmatprep.subr.mxu0 0.0
    %112 = vmatpush1.msra.mxu0 0.0
    %113 = vmatprep.subr.mxu0 0.0
    %114 = vmatpush1.msra.mxu0 0.0
    %115 = vmatprep.subr.mxu0 0.0
    %116 = vmatpush1.msra.mxu0 0.0
    %117 = vmatprep.subr.mxu0 0.0
    %118 = vmatpush1.msra.mxu0 0.0
    %119 = vmatprep.subr.mxu0 0.0
    %120 = vmatpush1.msra.mxu0 0.0
    %121 = vmatprep.subr.mxu0 0.0
    %122 = vmatpush1.msra.mxu0 0.0
    %123 = vmatprep.subr.mxu0 0.0
    %124 = vmatpush1.msra.mxu0 0.0
    %125 = vmatprep.subr.mxu0 0.0
    %126 = vmatpush1.msra.mxu0 0.0
    %127 = vmatprep.subr.mxu0 0.0
    %128 = vmatpush1.msra.mxu0 0.0
    %129 = vmatprep.subr.mxu0 0.0
    %130 = vmatpush1.msra.mxu0 0.0
    %131 = vmatprep.subr.mxu0 0.0
    %132 = vmatpush1.msra.mxu0 0.0
    %133 = vmatprep.subr.mxu0 0.0
    %134 = vmatpush1.msra.mxu0 0.0
    %135 = vmatprep.subr.mxu0 0.0
    %136 = vmatpush1.msra.mxu0 0.0
    %137 = vmatprep.subr.mxu0 0.0
    %138 = vmatpush1.msra.mxu0 0.0
    %139 = vmatprep.subr.mxu0 0.0
    %140 = vmatpush1.msra.mxu0 0.0
    %141 = vmatprep.subr.mxu0 0.0
    %142 = vmatpush1.msra.mxu0 0.0
    %143 = vmatprep.subr.mxu0 0.0
    %144 = vmatpush1.msra.mxu0 0.0
    %145 = vmatprep.subr.mxu0 0.0
    %146 = vmatpush1.msra.mxu0 0.0
    %147 = vmatprep.subr.mxu0 0.0
    %148 = vmatpush1.msra.mxu0 0.0
    %149 = vmatprep.subr.mxu0 0.0
    %150 = vmatpush1.msra.mxu0 0.0
    %151 = vmatprep.subr.mxu0 0.0
    %152 = vmatpush1.msra.mxu0 0.0
    %153 = vmatprep.subr.mxu0 0.0
    %154 = vmatpush1.msra.mxu0 0.0
    %155 = vmatprep.subr.mxu0 0.0
    %156 = vmatpush1.msra.mxu0 0.0
    %157 = vmatprep.subr.mxu0 0.0
    %158 = vmatpush1.msra.mxu0 0.0
    %159 = vmatprep.subr.mxu0 0.0
    %160 = vmatpush1.msra.mxu0 0.0
    %161 = vmatprep.mubr.f32.mxu0 0.0
    %162 = vmatmul.mubr.f32.gmra.mrb[0].mxu0 %v67
    %v163 = vpop.f32.mrb[0].mxu0
    %v164 = vadd.f32 %v58, %v163
    %v165 = vpop.f32.mrb[0].mxu0
    %v166 = vadd.f32 %v62, %v165
    %167 = vmatprep.mubr.f32.mxu0 0.0
    %168 = vmatmul.mubr.f32.gmra.mrb[0].mxu0 %v70
    %v169 = vpop.f32.mrb[0].mxu0
    %v170 = vadd.f32 %v58, %v169
    %v171 = vpop.f32.mrb[0].mxu0
    %v172 = vadd.f32 %v62, %v171
    %173 = vmatprep.mubr.f32.mxu0 0.0
    %174 = vmatmul.mubr.f32.gmra.mrb[0].mxu0 %v73
    %v175 = vpop.f32.mrb[0].mxu0
    %v176 = vadd.f32 %v58, %v175
    %v177 = vpop.f32.mrb[0].mxu0
    %v178 = vadd.f32 %v62, %v177
    %179 = vmatprep.mubr.f32.mxu0 0.0
    %180 = vmatmul.mubr.f32.gmra.mrb[0].mxu0 %v76
    %v181 = vpop.f32.mrb[0].mxu0
    %v182 = vadd.f32 %v58, %v181
    %v183 = vpop.f32.mrb[0].mxu0
    %v184 = vadd.f32 %v62, %v183
    %185 = vmatprep.mubr.f32.mxu0 0.0
    %186 = vmatmul.mubr.f32.gmra.mrb[0].mxu0 %v79
    %v187 = vpop.f32.mrb[0].mxu0
    %v188 = vadd.f32 %v58, %v187
    %v189 = vpop.f32.mrb[0].mxu0
    %v190 = vadd.f32 %v62, %v189
    %191 = vmatprep.mubr.f32.mxu0 0.0
    %192 = vmatmul.mubr.f32.gmra.mrb[0].mxu0 %v82
    %v193 = vpop.f32.mrb[0].mxu0
    %v194 = vadd.f32 %v58, %v193
    %v195 = vpop.f32.mrb[0].mxu0
    %v196 = vadd.f32 %v62, %v195
    %197 = vmatprep.mubr.f32.mxu0 0.0
    %198 = vmatmul.mubr.f32.gmra.mrb[0].mxu0 %v85
    %v199 = vpop.f32.mrb[0].mxu0
    %v200 = vadd.f32 %v58, %v199
    %v201 = vpop.f32.mrb[0].mxu0
    %v202 = vadd.f32 %v62, %v201
    %203 = vmatprep.mubr.f32.mxu0 0.0
    %204 = vmatmul.mubr.f32.gmra.mrb[0].mxu0 %v88
    %v205 = vpop.f32.mrb[0].mxu0
    %v206 = vadd.f32 %v58, %v205
    %v207 = vpop.f32.mrb[0].mxu0
    %v208 = vadd.f32 %v62, %v207
    %209 = vdwg.mxu0
    %210 = vst [vmem:[#allocation2] sm:$0xff] %v164
    %211 = vst [vmem:[#allocation2 + $0x8] sm:$0xff] %v166
    %212 = vst [vmem:[#allocation2 + $0x10] sm:$0xff] %v170
    %213 = vst [vmem:[#allocation2 + $0x18] sm:$0xff] %v172
    %214 = vst [vmem:[#allocation2 + $0x20] sm:$0xff] %v176
    %215 = vst [vmem:[#allocation2 + $0x28] sm:$0xff] %v178
    %216 = vst [vmem:[#allocation2 + $0x30] sm:$0xff] %v182
    %217 = vst [vmem:[#allocation2 + $0x38] sm:$0xff] %v184
    %218 = vst [vmem:[#allocation2 + $0x40] sm:$0xff] %v188
    %219 = vst [vmem:[#allocation2 + $0x48] sm:$0xff] %v190
    %220 = vst [vmem:[#allocation2 + $0x50] sm:$0xff] %v194
    %221 = vst [vmem:[#allocation2 + $0x58] sm:$0xff] %v196
    %222 = vst [vmem:[#allocation2 + $0x60] sm:$0xff] %v200
    %223 = vst [vmem:[#allocation2 + $0x68] sm:$0xff] %v202
    %224 = vst [vmem:[#allocation2 + $0x70] sm:$0xff] %v206
    %225 = vst [vmem:[#allocation2 + $0x78] sm:$0xff] %v208
    %v226 = vld [vmem:[#allocation3] sm:$0xff]
    %v227 = vld [vmem:[#allocation3 + $0x8] sm:$0xff]
    %v228 = vld [vmem:[#allocation3 + $0x10] sm:$0xff]
    %v229 = vld [vmem:[#allocation3 + $0x18] sm:$0xff]
    %v230 = vld [vmem:[#allocation3 + $0x20] sm:$0xff]
    %v231 = vld [vmem:[#allocation3 + $0x28] sm:$0xff]
    %v232 = vld [vmem:[#allocation3 + $0x30] sm:$0xff]
    %v233 = vld [vmem:[#allocation3 + $0x38] sm:$0xff]
    %v234 = vld [vmem:[#allocation3 + $0x40] sm:$0xff]
    %v235 = vld [vmem:[#allocation3 + $0x48] sm:$0xff]
    %v236 = vld [vmem:[#allocation3 + $0x50] sm:$0xff]
    %v237 = vld [vmem:[#allocation3 + $0x58] sm:$0xff]
    %v238 = vld [vmem:[#allocation3 + $0x60] sm:$0xff]
    %v239 = vld [vmem:[#allocation3 + $0x68] sm:$0xff]
    %v240 = vld [vmem:[#allocation3 + $0x70] sm:$0xff]
    %v241 = vld [vmem:[#allocation3 + $0x78] sm:$0xff]
    %s242 = smul.u32 0, 2
    %s243 = smul.addr %s242, 8
    %s244 = scalar_lea.vmem [#allocation2], %s243
    %v245 = vld [vmem:[%s244] sm:$0xff]
    %v246 = vld [vmem:[%s244 + $0x8] sm:$0xff]
    %vm247 = vcmask 523264
    %v249 = vsel %vm247, 0.0, 0
    %251 = vmatprep.subr.mxu0 %v227
    %252 = vmatpush1.msra.mxu0 %v226
    %253 = vmatprep.subr.mxu0 %v229
    %254 = vmatpush1.msra.mxu0 %v228
    %255 = vmatprep.subr.mxu0 %v231
    %256 = vmatpush1.msra.mxu0 %v230
    %257 = vmatprep.subr.mxu0 %v233
    %258 = vmatpush1.msra.mxu0 %v232
    %259 = vmatprep.subr.mxu0 %v235
    %260 = vmatpush1.msra.mxu0 %v234
    %261 = vmatprep.subr.mxu0 %v237
    %262 = vmatpush1.msra.mxu0 %v236
    %263 = vmatprep.subr.mxu0 %v239
    %264 = vmatpush1.msra.mxu0 %v238
    %265 = vmatprep.subr.mxu0 %v241
    %266 = vmatpush1.msra.mxu0 %v240
    %267 = vmatprep.subr.mxu0 0.0
    %268 = vmatpush1.msra.mxu0 0.0
    %269 = vmatprep.subr.mxu0 0.0
    %270 = vmatpush1.msra.mxu0 0.0
    %271 = vmatprep.subr.mxu0 0.0
    %272 = vmatpush1.msra.mxu0 0.0
    %273 = vmatprep.subr.mxu0 0.0
    %274 = vmatpush1.msra.mxu0 0.0
    %275 = vmatprep.subr.mxu0 0.0
    %276 = vmatpush1.msra.mxu0 0.0
    %277 = vmatprep.subr.mxu0 0.0
    %278 = vmatpush1.msra.mxu0 0.0
    %279 = vmatprep.subr.mxu0 0.0
    %280 = vmatpush1.msra.mxu0 0.0
    %281 = vmatprep.subr.mxu0 0.0
    %282 = vmatpush1.msra.mxu0 0.0
    %283 = vmatprep.subr.mxu0 0.0
    %284 = vmatpush1.msra.mxu0 0.0
    %285 = vmatprep.subr.mxu0 0.0
    %286 = vmatpush1.msra.mxu0 0.0
    %287 = vmatprep.subr.mxu0 0.0
    %288 = vmatpush1.msra.mxu0 0.0
    %289 = vmatprep.subr.mxu0 0.0
    %290 = vmatpush1.msra.mxu0 0.0
    %291 = vmatprep.subr.mxu0 0.0
    %292 = vmatpush1.msra.mxu0 0.0
    %293 = vmatprep.subr.mxu0 0.0
    %294 = vmatpush1.msra.mxu0 0.0
    %295 = vmatprep.subr.mxu0 0.0
    %296 = vmatpush1.msra.mxu0 0.0
    %297 = vmatprep.subr.mxu0 0.0
    %298 = vmatpush1.msra.mxu0 0.0
    %299 = vmatprep.subr.mxu0 0.0
    %300 = vmatpush1.msra.mxu0 0.0
    %301 = vmatprep.subr.mxu0 0.0
    %302 = vmatpush1.msra.mxu0 0.0
    %303 = vmatprep.subr.mxu0 0.0
    %304 = vmatpush1.msra.mxu0 0.0
    %305 = vmatprep.subr.mxu0 0.0
    %306 = vmatpush1.msra.mxu0 0.0
    %307 = vmatprep.subr.mxu0 0.0
    %308 = vmatpush1.msra.mxu0 0.0
    %309 = vmatprep.subr.mxu0 0.0
    %310 = vmatpush1.msra.mxu0 0.0
    %311 = vmatprep.subr.mxu0 0.0
    %312 = vmatpush1.msra.mxu0 0.0
    %313 = vmatprep.subr.mxu0 0.0
    %314 = vmatpush1.msra.mxu0 0.0
    %315 = vmatprep.mubr.f32.mxu0 0.0
    %316 = vmatmul.mubr.f32.gmra.mrb[0].mxu0 %v249
    %v317 = vpop.f32.mrb[0].mxu0
    %v318 = vadd.f32 0.0, %v317
    %v319 = vpop.f32.mrb[0].mxu0
    %v320 = vadd.f32 0.0, %v319
    %321 = vdwg.mxu0
    %v322 = vadd.f32 %v245, %v318
    %v323 = vadd.f32 %v246, %v320
    %v324 = vxor.u32 %v322, 2147483648
    %v325 = vxor.u32 %v323, 2147483648
    %v326 = vmul.f32 %v324, 1.442695
    %v327 = vpow.pop %v326
    %v328 = vmul.f32 %v325, 1.442695
    %v329 = vpow.pop %v328
    %v330 = vadd.f32 %v327, 1.0
    %v331 = vadd.f32 %v329, 1.0
    %v332 = vrcp.pop %v330
    %v333 = vmul.f32 1.0, %v332
    %v334 = vrcp.pop %v331
    %v335 = vmul.f32 1.0, %v334
    %v336 = vtanh.pop %v323
    %v337 = vmul.f32 %v333, 0.0
    %339 = vrot.lane.b32.xlu0 %v336, 64
    %v340 = vpop.permute.xlu0 %339
    %v342 = vmul.f32 %v333, %v340
    %344 = vrot.lane.b32.xlu0 %v342, 64
    %v345 = vpop.permute.xlu0 %344
    %v347 = vadd.f32 %v337, %v345
    %v348 = vtanh.pop %v347
    %350 = vrot.lane.b32.xlu0 %v348, 64
    %v351 = vpop.permute.xlu0 %350
    %v353 = vmul.f32 %v335, %v351
    %s354 = smul.u32 1, 2
    %s355 = smul.addr %s354, 8
    %s356 = scalar_lea.vmem [#allocation2], %s355
    %v357 = vld [vmem:[%s356] sm:$0xff]
    %v358 = vld [vmem:[%s356 + $0x8] sm:$0xff]
    %v360 = vsel %vm247, %v353, 0
    %362 = vmatprep.subr.mxu0 %v227
    %363 = vmatpush1.msra.mxu0 %v226
    %364 = vmatprep.subr.mxu0 %v229
    %365 = vmatpush1.msra.mxu0 %v228
    %366 = vmatprep.subr.mxu0 %v231
    %367 = vmatpush1.msra.mxu0 %v230
    %368 = vmatprep.subr.mxu0 %v233
    %369 = vmatpush1.msra.mxu0 %v232
    %370 = vmatprep.subr.mxu0 %v235
    %371 = vmatpush1.msra.mxu0 %v234
    %372 = vmatprep.subr.mxu0 %v237
    %373 = vmatpush1.msra.mxu0 %v236
    %374 = vmatprep.subr.mxu0 %v239
    %375 = vmatpush1.msra.mxu0 %v238
    %376 = vmatprep.subr.mxu0 %v241
    %377 = vmatpush1.msra.mxu0 %v240
    %378 = vmatprep.subr.mxu0 0.0
    %379 = vmatpush1.msra.mxu0 0.0
    %380 = vmatprep.subr.mxu0 0.0
    %381 = vmatpush1.msra.mxu0 0.0
    %382 = vmatprep.subr.mxu0 0.0
    %383 = vmatpush1.msra.mxu0 0.0
    %384 = vmatprep.subr.mxu0 0.0
    %385 = vmatpush1.msra.mxu0 0.0
    %386 = vmatprep.subr.mxu0 0.0
    %387 = vmatpush1.msra.mxu0 0.0
    %388 = vmatprep.subr.mxu0 0.0
    %389 = vmatpush1.msra.mxu0 0.0
    %390 = vmatprep.subr.mxu0 0.0
    %391 = vmatpush1.msra.mxu0 0.0
    %392 = vmatprep.subr.mxu0 0.0
    %393 = vmatpush1.msra.mxu0 0.0
    %394 = vmatprep.subr.mxu0 0.0
    %395 = vmatpush1.msra.mxu0 0.0
    %396 = vmatprep.subr.mxu0 0.0
    %397 = vmatpush1.msra.mxu0 0.0
    %398 = vmatprep.subr.mxu0 0.0
    %399 = vmatpush1.msra.mxu0 0.0
    %400 = vmatprep.subr.mxu0 0.0
    %401 = vmatpush1.msra.mxu0 0.0
    %402 = vmatprep.subr.mxu0 0.0
    %403 = vmatpush1.msra.mxu0 0.0
    %404 = vmatprep.subr.mxu0 0.0
    %405 = vmatpush1.msra.mxu0 0.0
    %406 = vmatprep.subr.mxu0 0.0
    %407 = vmatpush1.msra.mxu0 0.0
    %408 = vmatprep.subr.mxu0 0.0
    %409 = vmatpush1.msra.mxu0 0.0
    %410 = vmatprep.subr.mxu0 0.0
    %411 = vmatpush1.msra.mxu0 0.0
    %412 = vmatprep.subr.mxu0 0.0
    %413 = vmatpush1.msra.mxu0 0.0
    %414 = vmatprep.subr.mxu0 0.0
    %415 = vmatpush1.msra.mxu0 0.0
    %416 = vmatprep.subr.mxu0 0.0
    %417 = vmatpush1.msra.mxu0 0.0
    %418 = vmatprep.subr.mxu0 0.0
    %419 = vmatpush1.msra.mxu0 0.0
    %420 = vmatprep.subr.mxu0 0.0
    %421 = vmatpush1.msra.mxu0 0.0
    %422 = vmatprep.subr.mxu0 0.0
    %423 = vmatpush1.msra.mxu0 0.0
    %424 = vmatprep.subr.mxu0 0.0
    %425 = vmatpush1.msra.mxu0 0.0
    %426 = vmatprep.mubr.f32.mxu0 0.0
    %427 = vmatmul.mubr.f32.gmra.mrb[0].mxu0 %v360
    %v428 = vpop.f32.mrb[0].mxu0
    %v429 = vadd.f32 0.0, %v428
    %v430 = vpop.f32.mrb[0].mxu0
    %v431 = vadd.f32 0.0, %v430
    %432 = vdwg.mxu0
    %v433 = vadd.f32 %v357, %v429
    %v434 = vadd.f32 %v358, %v431
    %v435 = vxor.u32 %v433, 2147483648
    %v436 = vxor.u32 %v434, 2147483648
    %v437 = vmul.f32 %v435, 1.442695
    %v438 = vpow.pop %v437
    %v439 = vmul.f32 %v436, 1.442695
    %v440 = vpow.pop %v439
    %v441 = vadd.f32 %v438, 1.0
    %v442 = vadd.f32 %v440, 1.0
    %v443 = vrcp.pop %v441
    %v444 = vmul.f32 1.0, %v443
    %v445 = vrcp.pop %v442
    %v446 = vmul.f32 1.0, %v445
    %v447 = vtanh.pop %v434
    %v448 = vmul.f32 %v444, %v347
    %450 = vrot.lane.b32.xlu0 %v447, 64
    %v451 = vpop.permute.xlu0 %450
    %v453 = vmul.f32 %v444, %v451
    %455 = vrot.lane.b32.xlu0 %v453, 64
    %v456 = vpop.permute.xlu0 %455
    %v458 = vadd.f32 %v448, %v456
    %v459 = vtanh.pop %v458
    %461 = vrot.lane.b32.xlu0 %v459, 64
    %v462 = vpop.permute.xlu0 %461
    %v464 = vmul.f32 %v446, %v462
    %s465 = smul.u32 2, 2
    %s466 = smul.addr %s465, 8
    %s467 = scalar_lea.vmem [#allocation2], %s466
    %v468 = vld [vmem:[%s467] sm:$0xff]
    %v469 = vld [vmem:[%s467 + $0x8] sm:$0xff]
    %v471 = vsel %vm247, %v464, 0
    %473 = vmatprep.subr.mxu0 %v227
    %474 = vmatpush1.msra.mxu0 %v226
    %475 = vmatprep.subr.mxu0 %v229
    %476 = vmatpush1.msra.mxu0 %v228
    %477 = vmatprep.subr.mxu0 %v231
    %478 = vmatpush1.msra.mxu0 %v230
    %479 = vmatprep.subr.mxu0 %v233
    %480 = vmatpush1.msra.mxu0 %v232
    %481 = vmatprep.subr.mxu0 %v235
    %482 = vmatpush1.msra.mxu0 %v234
    %483 = vmatprep.subr.mxu0 %v237
    %484 = vmatpush1.msra.mxu0 %v236
    %485 = vmatprep.subr.mxu0 %v239
    %486 = vmatpush1.msra.mxu0 %v238
    %487 = vmatprep.subr.mxu0 %v241
    %488 = vmatpush1.msra.mxu0 %v240
    %489 = vmatprep.subr.mxu0 0.0
    %490 = vmatpush1.msra.mxu0 0.0
    %491 = vmatprep.subr.mxu0 0.0
    %492 = vmatpush1.msra.mxu0 0.0
    %493 = vmatprep.subr.mxu0 0.0
    %494 = vmatpush1.msra.mxu0 0.0
    %495 = vmatprep.subr.mxu0 0.0
    %496 = vmatpush1.msra.mxu0 0.0
    %497 = vmatprep.subr.mxu0 0.0
    %498 = vmatpush1.msra.mxu0 0.0
    %499 = vmatprep.subr.mxu0 0.0
    %500 = vmatpush1.msra.mxu0 0.0
    %501 = vmatprep.subr.mxu0 0.0
    %502 = vmatpush1.msra.mxu0 0.0
    %503 = vmatprep.subr.mxu0 0.0
    %504 = vmatpush1.msra.mxu0 0.0
    %505 = vmatprep.subr.mxu0 0.0
    %506 = vmatpush1.msra.mxu0 0.0
    %507 = vmatprep.subr.mxu0 0.0
    %508 = vmatpush1.msra.mxu0 0.0
    %509 = vmatprep.subr.mxu0 0.0
    %510 = vmatpush1.msra.mxu0 0.0
    %511 = vmatprep.subr.mxu0 0.0
    %512 = vmatpush1.msra.mxu0 0.0
    %513 = vmatprep.subr.mxu0 0.0
    %514 = vmatpush1.msra.mxu0 0.0
    %515 = vmatprep.subr.mxu0 0.0
    %516 = vmatpush1.msra.mxu0 0.0
    %517 = vmatprep.subr.mxu0 0.0
    %518 = vmatpush1.msra.mxu0 0.0
    %519 = vmatprep.subr.mxu0 0.0
    %520 = vmatpush1.msra.mxu0 0.0
    %521 = vmatprep.subr.mxu0 0.0
    %522 = vmatpush1.msra.mxu0 0.0
    %523 = vmatprep.subr.mxu0 0.0
    %524 = vmatpush1.msra.mxu0 0.0
    %525 = vmatprep.subr.mxu0 0.0
    %526 = vmatpush1.msra.mxu0 0.0
    %527 = vmatprep.subr.mxu0 0.0
    %528 = vmatpush1.msra.mxu0 0.0
    %529 = vmatprep.subr.mxu0 0.0
    %530 = vmatpush1.msra.mxu0 0.0
    %531 = vmatprep.subr.mxu0 0.0
    %532 = vmatpush1.msra.mxu0 0.0
    %533 = vmatprep.subr.mxu0 0.0
    %534 = vmatpush1.msra.mxu0 0.0
    %535 = vmatprep.subr.mxu0 0.0
    %536 = vmatpush1.msra.mxu0 0.0
    %537 = vmatprep.mubr.f32.mxu0 0.0
    %538 = vmatmul.mubr.f32.gmra.mrb[0].mxu0 %v471
    %v539 = vpop.f32.mrb[0].mxu0
    %v540 = vadd.f32 0.0, %v539
    %v541 = vpop.f32.mrb[0].mxu0
    %v542 = vadd.f32 0.0, %v541
    %543 = vdwg.mxu0
    %v544 = vadd.f32 %v468, %v540
    %v545 = vadd.f32 %v469, %v542
    %v546 = vxor.u32 %v544, 2147483648
    %v547 = vxor.u32 %v545, 2147483648
    %v548 = vmul.f32 %v546, 1.442695
    %v549 = vpow.pop %v548
    %v550 = vmul.f32 %v547, 1.442695
    %v551 = vpow.pop %v550
    %v552 = vadd.f32 %v549, 1.0
    %v553 = vadd.f32 %v551, 1.0
    %v554 = vrcp.pop %v552
    %v555 = vmul.f32 1.0, %v554
    %v556 = vrcp.pop %v553
    %v557 = vmul.f32 1.0, %v556
    %v558 = vtanh.pop %v545
    %v559 = vmul.f32 %v555, %v458
    %561 = vrot.lane.b32.xlu0 %v558, 64
    %v562 = vpop.permute.xlu0 %561
    %v564 = vmul.f32 %v555, %v562
    %566 = vrot.lane.b32.xlu0 %v564, 64
    %v567 = vpop.permute.xlu0 %566
    %v569 = vadd.f32 %v559, %v567
    %v570 = vtanh.pop %v569
    %572 = vrot.lane.b32.xlu0 %v570, 64
    %v573 = vpop.permute.xlu0 %572
    %v575 = vmul.f32 %v557, %v573
    %s576 = smul.u32 3, 2
    %s577 = smul.addr %s576, 8
    %s578 = scalar_lea.vmem [#allocation2], %s577
    %v579 = vld [vmem:[%s578] sm:$0xff]
    %v580 = vld [vmem:[%s578 + $0x8] sm:$0xff]
    %v582 = vsel %vm247, %v575, 0
    %584 = vmatprep.subr.mxu0 %v227
    %585 = vmatpush1.msra.mxu0 %v226
    %586 = vmatprep.subr.mxu0 %v229
    %587 = vmatpush1.msra.mxu0 %v228
    %588 = vmatprep.subr.mxu0 %v231
    %589 = vmatpush1.msra.mxu0 %v230
    %590 = vmatprep.subr.mxu0 %v233
    %591 = vmatpush1.msra.mxu0 %v232
    %592 = vmatprep.subr.mxu0 %v235
    %593 = vmatpush1.msra.mxu0 %v234
    %594 = vmatprep.subr.mxu0 %v237
    %595 = vmatpush1.msra.mxu0 %v236
    %596 = vmatprep.subr.mxu0 %v239
    %597 = vmatpush1.msra.mxu0 %v238
    %598 = vmatprep.subr.mxu0 %v241
    %599 = vmatpush1.msra.mxu0 %v240
    %600 = vmatprep.subr.mxu0 0.0
    %601 = vmatpush1.msra.mxu0 0.0
    %602 = vmatprep.subr.mxu0 0.0
    %603 = vmatpush1.msra.mxu0 0.0
    %604 = vmatprep.subr.mxu0 0.0
    %605 = vmatpush1.msra.mxu0 0.0
    %606 = vmatprep.subr.mxu0 0.0
    %607 = vmatpush1.msra.mxu0 0.0
    %608 = vmatprep.subr.mxu0 0.0
    %609 = vmatpush1.msra.mxu0 0.0
    %610 = vmatprep.subr.mxu0 0.0
    %611 = vmatpush1.msra.mxu0 0.0
    %612 = vmatprep.subr.mxu0 0.0
    %613 = vmatpush1.msra.mxu0 0.0
    %614 = vmatprep.subr.mxu0 0.0
    %615 = vmatpush1.msra.mxu0 0.0
    %616 = vmatprep.subr.mxu0 0.0
    %617 = vmatpush1.msra.mxu0 0.0
    %618 = vmatprep.subr.mxu0 0.0
    %619 = vmatpush1.msra.mxu0 0.0
    %620 = vmatprep.subr.mxu0 0.0
    %621 = vmatpush1.msra.mxu0 0.0
    %622 = vmatprep.subr.mxu0 0.0
    %623 = vmatpush1.msra.mxu0 0.0
    %624 = vmatprep.subr.mxu0 0.0
    %625 = vmatpush1.msra.mxu0 0.0
    %626 = vmatprep.subr.mxu0 0.0
    %627 = vmatpush1.msra.mxu0 0.0
    %628 = vmatprep.subr.mxu0 0.0
    %629 = vmatpush1.msra.mxu0 0.0
    %630 = vmatprep.subr.mxu0 0.0
    %631 = vmatpush1.msra.mxu0 0.0
    %632 = vmatprep.subr.mxu0 0.0
    %633 = vmatpush1.msra.mxu0 0.0
    %634 = vmatprep.subr.mxu0 0.0
    %635 = vmatpush1.msra.mxu0 0.0
    %636 = vmatprep.subr.mxu0 0.0
    %637 = vmatpush1.msra.mxu0 0.0
    %638 = vmatprep.subr.mxu0 0.0
    %639 = vmatpush1.msra.mxu0 0.0
    %640 = vmatprep.subr.mxu0 0.0
    %641 = vmatpush1.msra.mxu0 0.0
    %642 = vmatprep.subr.mxu0 0.0
    %643 = vmatpush1.msra.mxu0 0.0
    %644 = vmatprep.subr.mxu0 0.0
    %645 = vmatpush1.msra.mxu0 0.0
    %646 = vmatprep.subr.mxu0 0.0
    %647 = vmatpush1.msra.mxu0 0.0
    %648 = vmatprep.mubr.f32.mxu0 0.0
    %649 = vmatmul.mubr.f32.gmra.mrb[0].mxu0 %v582
    %v650 = vpop.f32.mrb[0].mxu0
    %v651 = vadd.f32 0.0, %v650
    %v652 = vpop.f32.mrb[0].mxu0
    %v653 = vadd.f32 0.0, %v652
    %654 = vdwg.mxu0
    %v655 = vadd.f32 %v579, %v651
    %v656 = vadd.f32 %v580, %v653
    %v657 = vxor.u32 %v655, 2147483648
    %v658 = vxor.u32 %v656, 2147483648
    %v659 = vmul.f32 %v657, 1.442695
    %v660 = vpow.pop %v659
    %v661 = vmul.f32 %v658, 1.442695
    %v662 = vpow.pop %v661
    %v663 = vadd.f32 %v660, 1.0
    %v664 = vadd.f32 %v662, 1.0
    %v665 = vrcp.pop %v663
    %v666 = vmul.f32 1.0, %v665
    %v667 = vrcp.pop %v664
    %v668 = vmul.f32 1.0, %v667
    %v669 = vtanh.pop %v656
    %v670 = vmul.f32 %v666, %v569
    %672 = vrot.lane.b32.xlu0 %v669, 64
    %v673 = vpop.permute.xlu0 %672
    %v675 = vmul.f32 %v666, %v673
    %677 = vrot.lane.b32.xlu0 %v675, 64
    %v678 = vpop.permute.xlu0 %677
    %v680 = vadd.f32 %v670, %v678
    %v681 = vtanh.pop %v680
    %683 = vrot.lane.b32.xlu0 %v681, 64
    %v684 = vpop.permute.xlu0 %683
    %v686 = vmul.f32 %v668, %v684
    %s687 = smul.u32 4, 2
    %s688 = smul.addr %s687, 8
    %s689 = scalar_lea.vmem [#allocation2], %s688
    %v690 = vld [vmem:[%s689] sm:$0xff]
    %v691 = vld [vmem:[%s689 + $0x8] sm:$0xff]
    %v693 = vsel %vm247, %v686, 0
    %695 = vmatprep.subr.mxu0 %v227
    %696 = vmatpush1.msra.mxu0 %v226
    %697 = vmatprep.subr.mxu0 %v229
    %698 = vmatpush1.msra.mxu0 %v228
    %699 = vmatprep.subr.mxu0 %v231
    %700 = vmatpush1.msra.mxu0 %v230
    %701 = vmatprep.subr.mxu0 %v233
    %702 = vmatpush1.msra.mxu0 %v232
    %703 = vmatprep.subr.mxu0 %v235
    %704 = vmatpush1.msra.mxu0 %v234
    %705 = vmatprep.subr.mxu0 %v237
    %706 = vmatpush1.msra.mxu0 %v236
    %707 = vmatprep.subr.mxu0 %v239
    %708 = vmatpush1.msra.mxu0 %v238
    %709 = vmatprep.subr.mxu0 %v241
    %710 = vmatpush1.msra.mxu0 %v240
    %711 = vmatprep.subr.mxu0 0.0
    %712 = vmatpush1.msra.mxu0 0.0
    %713 = vmatprep.subr.mxu0 0.0
    %714 = vmatpush1.msra.mxu0 0.0
    %715 = vmatprep.subr.mxu0 0.0
    %716 = vmatpush1.msra.mxu0 0.0
    %717 = vmatprep.subr.mxu0 0.0
    %718 = vmatpush1.msra.mxu0 0.0
    %719 = vmatprep.subr.mxu0 0.0
    %720 = vmatpush1.msra.mxu0 0.0
    %721 = vmatprep.subr.mxu0 0.0
    %722 = vmatpush1.msra.mxu0 0.0
    %723 = vmatprep.subr.mxu0 0.0
    %724 = vmatpush1.msra.mxu0 0.0
    %725 = vmatprep.subr.mxu0 0.0
    %726 = vmatpush1.msra.mxu0 0.0
    %727 = vmatprep.subr.mxu0 0.0
    %728 = vmatpush1.msra.mxu0 0.0
    %729 = vmatprep.subr.mxu0 0.0
    %730 = vmatpush1.msra.mxu0 0.0
    %731 = vmatprep.subr.mxu0 0.0
    %732 = vmatpush1.msra.mxu0 0.0
    %733 = vmatprep.subr.mxu0 0.0
    %734 = vmatpush1.msra.mxu0 0.0
    %735 = vmatprep.subr.mxu0 0.0
    %736 = vmatpush1.msra.mxu0 0.0
    %737 = vmatprep.subr.mxu0 0.0
    %738 = vmatpush1.msra.mxu0 0.0
    %739 = vmatprep.subr.mxu0 0.0
    %740 = vmatpush1.msra.mxu0 0.0
    %741 = vmatprep.subr.mxu0 0.0
    %742 = vmatpush1.msra.mxu0 0.0
    %743 = vmatprep.subr.mxu0 0.0
    %744 = vmatpush1.msra.mxu0 0.0
    %745 = vmatprep.subr.mxu0 0.0
    %746 = vmatpush1.msra.mxu0 0.0
    %747 = vmatprep.subr.mxu0 0.0
    %748 = vmatpush1.msra.mxu0 0.0
    %749 = vmatprep.subr.mxu0 0.0
    %750 = vmatpush1.msra.mxu0 0.0
    %751 = vmatprep.subr.mxu0 0.0
    %752 = vmatpush1.msra.mxu0 0.0
    %753 = vmatprep.subr.mxu0 0.0
    %754 = vmatpush1.msra.mxu0 0.0
    %755 = vmatprep.subr.mxu0 0.0
    %756 = vmatpush1.msra.mxu0 0.0
    %757 = vmatprep.subr.mxu0 0.0
    %758 = vmatpush1.msra.mxu0 0.0
    %759 = vmatprep.mubr.f32.mxu0 0.0
    %760 = vmatmul.mubr.f32.gmra.mrb[0].mxu0 %v693
    %v761 = vpop.f32.mrb[0].mxu0
    %v762 = vadd.f32 0.0, %v761
    %v763 = vpop.f32.mrb[0].mxu0
    %v764 = vadd.f32 0.0, %v763
    %765 = vdwg.mxu0
    %v766 = vadd.f32 %v690, %v762
    %v767 = vadd.f32 %v691, %v764
    %v768 = vxor.u32 %v766, 2147483648
    %v769 = vxor.u32 %v767, 2147483648
    %v770 = vmul.f32 %v768, 1.442695
    %v771 = vpow.pop %v770
    %v772 = vmul.f32 %v769, 1.442695
    %v773 = vpow.pop %v772
    %v774 = vadd.f32 %v771, 1.0
    %v775 = vadd.f32 %v773, 1.0
    %v776 = vrcp.pop %v774
    %v777 = vmul.f32 1.0, %v776
    %v778 = vrcp.pop %v775
    %v779 = vmul.f32 1.0, %v778
    %v780 = vtanh.pop %v767
    %v781 = vmul.f32 %v777, %v680
    %783 = vrot.lane.b32.xlu0 %v780, 64
    %v784 = vpop.permute.xlu0 %783
    %v786 = vmul.f32 %v777, %v784
    %788 = vrot.lane.b32.xlu0 %v786, 64
    %v789 = vpop.permute.xlu0 %788
    %v791 = vadd.f32 %v781, %v789
    %v792 = vtanh.pop %v791
    %794 = vrot.lane.b32.xlu0 %v792, 64
    %v795 = vpop.permute.xlu0 %794
    %v797 = vmul.f32 %v779, %v795
    %s798 = smul.u32 5, 2
    %s799 = smul.addr %s798, 8
    %s800 = scalar_lea.vmem [#allocation2], %s799
    %v801 = vld [vmem:[%s800] sm:$0xff]
    %v802 = vld [vmem:[%s800 + $0x8] sm:$0xff]
    %v804 = vsel %vm247, %v797, 0
    %806 = vmatprep.subr.mxu0 %v227
    %807 = vmatpush1.msra.mxu0 %v226
    %808 = vmatprep.subr.mxu0 %v229
    %809 = vmatpush1.msra.mxu0 %v228
    %810 = vmatprep.subr.mxu0 %v231
    %811 = vmatpush1.msra.mxu0 %v230
    %812 = vmatprep.subr.mxu0 %v233
    %813 = vmatpush1.msra.mxu0 %v232
    %814 = vmatprep.subr.mxu0 %v235
    %815 = vmatpush1.msra.mxu0 %v234
    %816 = vmatprep.subr.mxu0 %v237
    %817 = vmatpush1.msra.mxu0 %v236
    %818 = vmatprep.subr.mxu0 %v239
    %819 = vmatpush1.msra.mxu0 %v238
    %820 = vmatprep.subr.mxu0 %v241
    %821 = vmatpush1.msra.mxu0 %v240
    %822 = vmatprep.subr.mxu0 0.0
    %823 = vmatpush1.msra.mxu0 0.0
    %824 = vmatprep.subr.mxu0 0.0
    %825 = vmatpush1.msra.mxu0 0.0
    %826 = vmatprep.subr.mxu0 0.0
    %827 = vmatpush1.msra.mxu0 0.0
    %828 = vmatprep.subr.mxu0 0.0
    %829 = vmatpush1.msra.mxu0 0.0
    %830 = vmatprep.subr.mxu0 0.0
    %831 = vmatpush1.msra.mxu0 0.0
    %832 = vmatprep.subr.mxu0 0.0
    %833 = vmatpush1.msra.mxu0 0.0
    %834 = vmatprep.subr.mxu0 0.0
    %835 = vmatpush1.msra.mxu0 0.0
    %836 = vmatprep.subr.mxu0 0.0
    %837 = vmatpush1.msra.mxu0 0.0
    %838 = vmatprep.subr.mxu0 0.0
    %839 = vmatpush1.msra.mxu0 0.0
    %840 = vmatprep.subr.mxu0 0.0
    %841 = vmatpush1.msra.mxu0 0.0
    %842 = vmatprep.subr.mxu0 0.0
    %843 = vmatpush1.msra.mxu0 0.0
    %844 = vmatprep.subr.mxu0 0.0
    %845 = vmatpush1.msra.mxu0 0.0
    %846 = vmatprep.subr.mxu0 0.0
    %847 = vmatpush1.msra.mxu0 0.0
    %848 = vmatprep.subr.mxu0 0.0
    %849 = vmatpush1.msra.mxu0 0.0
    %850 = vmatprep.subr.mxu0 0.0
    %851 = vmatpush1.msra.mxu0 0.0
    %852 = vmatprep.subr.mxu0 0.0
    %853 = vmatpush1.msra.mxu0 0.0
    %854 = vmatprep.subr.mxu0 0.0
    %855 = vmatpush1.msra.mxu0 0.0
    %856 = vmatprep.subr.mxu0 0.0
    %857 = vmatpush1.msra.mxu0 0.0
    %858 = vmatprep.subr.mxu0 0.0
    %859 = vmatpush1.msra.mxu0 0.0
    %860 = vmatprep.subr.mxu0 0.0
    %861 = vmatpush1.msra.mxu0 0.0
    %862 = vmatprep.subr.mxu0 0.0
    %863 = vmatpush1.msra.mxu0 0.0
    %864 = vmatprep.subr.mxu0 0.0
    %865 = vmatpush1.msra.mxu0 0.0
    %866 = vmatprep.subr.mxu0 0.0
    %867 = vmatpush1.msra.mxu0 0.0
    %868 = vmatprep.subr.mxu0 0.0
    %869 = vmatpush1.msra.mxu0 0.0
    %870 = vmatprep.mubr.f32.mxu0 0.0
    %871 = vmatmul.mubr.f32.gmra.mrb[0].mxu0 %v804
    %v872 = vpop.f32.mrb[0].mxu0
    %v873 = vadd.f32 0.0, %v872
    %v874 = vpop.f32.mrb[0].mxu0
    %v875 = vadd.f32 0.0, %v874
    %876 = vdwg.mxu0
    %v877 = vadd.f32 %v801, %v873
    %v878 = vadd.f32 %v802, %v875
    %v879 = vxor.u32 %v877, 2147483648
    %v880 = vxor.u32 %v878, 2147483648
    %v881 = vmul.f32 %v879, 1.442695
    %v882 = vpow.pop %v881
    %v883 = vmul.f32 %v880, 1.442695
    %v884 = vpow.pop %v883
    %v885 = vadd.f32 %v882, 1.0
    %v886 = vadd.f32 %v884, 1.0
    %v887 = vrcp.pop %v885
    %v888 = vmul.f32 1.0, %v887
    %v889 = vrcp.pop %v886
    %v890 = vmul.f32 1.0, %v889
    %v891 = vtanh.pop %v878
    %v892 = vmul.f32 %v888, %v791
    %894 = vrot.lane.b32.xlu0 %v891, 64
    %v895 = vpop.permute.xlu0 %894
    %v897 = vmul.f32 %v888, %v895
    %899 = vrot.lane.b32.xlu0 %v897, 64
    %v900 = vpop.permute.xlu0 %899
    %v902 = vadd.f32 %v892, %v900
    %v903 = vtanh.pop %v902
    %905 = vrot.lane.b32.xlu0 %v903, 64
    %v906 = vpop.permute.xlu0 %905
    %v908 = vmul.f32 %v890, %v906
    %s909 = smul.u32 6, 2
    %s910 = smul.addr %s909, 8
    %s911 = scalar_lea.vmem [#allocation2], %s910
    %v912 = vld [vmem:[%s911] sm:$0xff]
    %v913 = vld [vmem:[%s911 + $0x8] sm:$0xff]
    %v915 = vsel %vm247, %v908, 0
    %917 = vmatprep.subr.mxu0 %v227
    %918 = vmatpush1.msra.mxu0 %v226
    %919 = vmatprep.subr.mxu0 %v229
    %920 = vmatpush1.msra.mxu0 %v228
    %921 = vmatprep.subr.mxu0 %v231
    %922 = vmatpush1.msra.mxu0 %v230
    %923 = vmatprep.subr.mxu0 %v233
    %924 = vmatpush1.msra.mxu0 %v232
    %925 = vmatprep.subr.mxu0 %v235
    %926 = vmatpush1.msra.mxu0 %v234
    %927 = vmatprep.subr.mxu0 %v237
    %928 = vmatpush1.msra.mxu0 %v236
    %929 = vmatprep.subr.mxu0 %v239
    %930 = vmatpush1.msra.mxu0 %v238
    %931 = vmatprep.subr.mxu0 %v241
    %932 = vmatpush1.msra.mxu0 %v240
    %933 = vmatprep.subr.mxu0 0.0
    %934 = vmatpush1.msra.mxu0 0.0
    %935 = vmatprep.subr.mxu0 0.0
    %936 = vmatpush1.msra.mxu0 0.0
    %937 = vmatprep.subr.mxu0 0.0
    %938 = vmatpush1.msra.mxu0 0.0
    %939 = vmatprep.subr.mxu0 0.0
    %940 = vmatpush1.msra.mxu0 0.0
    %941 = vmatprep.subr.mxu0 0.0
    %942 = vmatpush1.msra.mxu0 0.0
    %943 = vmatprep.subr.mxu0 0.0
    %944 = vmatpush1.msra.mxu0 0.0
    %945 = vmatprep.subr.mxu0 0.0
    %946 = vmatpush1.msra.mxu0 0.0
    %947 = vmatprep.subr.mxu0 0.0
    %948 = vmatpush1.msra.mxu0 0.0
    %949 = vmatprep.subr.mxu0 0.0
    %950 = vmatpush1.msra.mxu0 0.0
    %951 = vmatprep.subr.mxu0 0.0
    %952 = vmatpush1.msra.mxu0 0.0
    %953 = vmatprep.subr.mxu0 0.0
    %954 = vmatpush1.msra.mxu0 0.0
    %955 = vmatprep.subr.mxu0 0.0
    %956 = vmatpush1.msra.mxu0 0.0
    %957 = vmatprep.subr.mxu0 0.0
    %958 = vmatpush1.msra.mxu0 0.0
    %959 = vmatprep.subr.mxu0 0.0
    %960 = vmatpush1.msra.mxu0 0.0
    %961 = vmatprep.subr.mxu0 0.0
    %962 = vmatpush1.msra.mxu0 0.0
    %963 = vmatprep.subr.mxu0 0.0
    %964 = vmatpush1.msra.mxu0 0.0
    %965 = vmatprep.subr.mxu0 0.0
    %966 = vmatpush1.msra.mxu0 0.0
    %967 = vmatprep.subr.mxu0 0.0
    %968 = vmatpush1.msra.mxu0 0.0
    %969 = vmatprep.subr.mxu0 0.0
    %970 = vmatpush1.msra.mxu0 0.0
    %971 = vmatprep.subr.mxu0 0.0
    %972 = vmatpush1.msra.mxu0 0.0
    %973 = vmatprep.subr.mxu0 0.0
    %974 = vmatpush1.msra.mxu0 0.0
    %975 = vmatprep.subr.mxu0 0.0
    %976 = vmatpush1.msra.mxu0 0.0
    %977 = vmatprep.subr.mxu0 0.0
    %978 = vmatpush1.msra.mxu0 0.0
    %979 = vmatprep.subr.mxu0 0.0
    %980 = vmatpush1.msra.mxu0 0.0
    %981 = vmatprep.mubr.f32.mxu0 0.0
    %982 = vmatmul.mubr.f32.gmra.mrb[0].mxu0 %v915
    %v983 = vpop.f32.mrb[0].mxu0
    %v984 = vadd.f32 0.0, %v983
    %v985 = vpop.f32.mrb[0].mxu0
    %v986 = vadd.f32 0.0, %v985
    %987 = vdwg.mxu0
    %v988 = vadd.f32 %v912, %v984
    %v989 = vadd.f32 %v913, %v986
    %v990 = vxor.u32 %v988, 2147483648
    %v991 = vxor.u32 %v989, 2147483648
    %v992 = vmul.f32 %v990, 1.442695
    %v993 = vpow.pop %v992
    %v994 = vmul.f32 %v991, 1.442695
    %v995 = vpow.pop %v994
    %v996 = vadd.f32 %v993, 1.0
    %v997 = vadd.f32 %v995, 1.0
    %v998 = vrcp.pop %v996
    %v999 = vmul.f32 1.0, %v998
    %v1000 = vrcp.pop %v997
    %v1001 = vmul.f32 1.0, %v1000
    %v1002 = vtanh.pop %v989
    %v1003 = vmul.f32 %v999, %v902
    %1005 = vrot.lane.b32.xlu0 %v1002, 64
    %v1006 = vpop.permute.xlu0 %1005
    %v1008 = vmul.f32 %v999, %v1006
    %1010 = vrot.lane.b32.xlu0 %v1008, 64
    %v1011 = vpop.permute.xlu0 %1010
    %v1013 = vadd.f32 %v1003, %v1011
    %v1014 = vtanh.pop %v1013
    %1016 = vrot.lane.b32.xlu0 %v1014, 64
    %v1017 = vpop.permute.xlu0 %1016
    %v1019 = vmul.f32 %v1001, %v1017
    %s1020 = smul.u32 7, 2
    %s1021 = smul.addr %s1020, 8
    %s1022 = scalar_lea.vmem [#allocation2], %s1021
    %v1023 = vld [vmem:[%s1022] sm:$0xff]
    %v1024 = vld [vmem:[%s1022 + $0x8] sm:$0xff]
    %v1026 = vsel %vm247, %v1019, 0
    %1028 = vmatprep.subr.mxu0 %v227
    %1029 = vmatpush1.msra.mxu0 %v226
    %1030 = vmatprep.subr.mxu0 %v229
    %1031 = vmatpush1.msra.mxu0 %v228
    %1032 = vmatprep.subr.mxu0 %v231
    %1033 = vmatpush1.msra.mxu0 %v230
    %1034 = vmatprep.subr.mxu0 %v233
    %1035 = vmatpush1.msra.mxu0 %v232
    %1036 = vmatprep.subr.mxu0 %v235
    %1037 = vmatpush1.msra.mxu0 %v234
    %1038 = vmatprep.subr.mxu0 %v237
    %1039 = vmatpush1.msra.mxu0 %v236
    %1040 = vmatprep.subr.mxu0 %v239
    %1041 = vmatpush1.msra.mxu0 %v238
    %1042 = vmatprep.subr.mxu0 %v241
    %1043 = vmatpush1.msra.mxu0 %v240
    %1044 = vmatprep.subr.mxu0 0.0
    %1045 = vmatpush1.msra.mxu0 0.0
    %1046 = vmatprep.subr.mxu0 0.0
    %1047 = vmatpush1.msra.mxu0 0.0
    %1048 = vmatprep.subr.mxu0 0.0
    %1049 = vmatpush1.msra.mxu0 0.0
    %1050 = vmatprep.subr.mxu0 0.0
    %1051 = vmatpush1.msra.mxu0 0.0
    %1052 = vmatprep.subr.mxu0 0.0
    %1053 = vmatpush1.msra.mxu0 0.0
    %1054 = vmatprep.subr.mxu0 0.0
    %1055 = vmatpush1.msra.mxu0 0.0
    %1056 = vmatprep.subr.mxu0 0.0
    %1057 = vmatpush1.msra.mxu0 0.0
    %1058 = vmatprep.subr.mxu0 0.0
    %1059 = vmatpush1.msra.mxu0 0.0
    %1060 = vmatprep.subr.mxu0 0.0
    %1061 = vmatpush1.msra.mxu0 0.0
    %1062 = vmatprep.subr.mxu0 0.0
    %1063 = vmatpush1.msra.mxu0 0.0
    %1064 = vmatprep.subr.mxu0 0.0
    %1065 = vmatpush1.msra.mxu0 0.0
    %1066 = vmatprep.subr.mxu0 0.0
    %1067 = vmatpush1.msra.mxu0 0.0
    %1068 = vmatprep.subr.mxu0 0.0
    %1069 = vmatpush1.msra.mxu0 0.0
    %1070 = vmatprep.subr.mxu0 0.0
    %1071 = vmatpush1.msra.mxu0 0.0
    %1072 = vmatprep.subr.mxu0 0.0
    %1073 = vmatpush1.msra.mxu0 0.0
    %1074 = vmatprep.subr.mxu0 0.0
    %1075 = vmatpush1.msra.mxu0 0.0
    %1076 = vmatprep.subr.mxu0 0.0
    %1077 = vmatpush1.msra.mxu0 0.0
    %1078 = vmatprep.subr.mxu0 0.0
    %1079 = vmatpush1.msra.mxu0 0.0
    %1080 = vmatprep.subr.mxu0 0.0
    %1081 = vmatpush1.msra.mxu0 0.0
    %1082 = vmatprep.subr.mxu0 0.0
    %1083 = vmatpush1.msra.mxu0 0.0
    %1084 = vmatprep.subr.mxu0 0.0
    %1085 = vmatpush1.msra.mxu0 0.0
    %1086 = vmatprep.subr.mxu0 0.0
    %1087 = vmatpush1.msra.mxu0 0.0
    %1088 = vmatprep.subr.mxu0 0.0
    %1089 = vmatpush1.msra.mxu0 0.0
    %1090 = vmatprep.subr.mxu0 0.0
    %1091 = vmatpush1.msra.mxu0 0.0
    %1092 = vmatprep.mubr.f32.mxu0 0.0
    %1093 = vmatmul.mubr.f32.gmra.mrb[0].mxu0 %v1026
    %v1094 = vpop.f32.mrb[0].mxu0
    %v1095 = vadd.f32 0.0, %v1094
    %v1096 = vpop.f32.mrb[0].mxu0
    %v1097 = vadd.f32 0.0, %v1096
    %1098 = vdwg.mxu0
    %v1099 = vadd.f32 %v1023, %v1095
    %v1100 = vadd.f32 %v1024, %v1097
    %v1101 = vxor.u32 %v1099, 2147483648
    %v1102 = vxor.u32 %v1100, 2147483648
    %v1103 = vmul.f32 %v1101, 1.442695
    %v1104 = vpow.pop %v1103
    %v1105 = vmul.f32 %v1102, 1.442695
    %v1106 = vpow.pop %v1105
    %v1107 = vadd.f32 %v1104, 1.0
    %v1108 = vadd.f32 %v1106, 1.0
    %v1109 = vrcp.pop %v1107
    %v1110 = vmul.f32 1.0, %v1109
    %v1111 = vrcp.pop %v1108
    %v1112 = vmul.f32 1.0, %v1111
    %v1113 = vtanh.pop %v1100
    %v1114 = vmul.f32 %v1110, %v1013
    %1116 = vrot.lane.b32.xlu0 %v1113, 64
    %v1117 = vpop.permute.xlu0 %1116
    %v1119 = vmul.f32 %v1110, %v1117
    %1121 = vrot.lane.b32.xlu0 %v1119, 64
    %v1122 = vpop.permute.xlu0 %1121
    %v1124 = vadd.f32 %v1114, %v1122
    %v1125 = vtanh.pop %v1124
    %1127 = vrot.lane.b32.xlu0 %v1125, 64
    %v1128 = vpop.permute.xlu0 %1127
    %v1130 = vmul.f32 %v1112, %v1128
    %v1131 = vld [vmem:[%s4] sm:$0xff]
    %v1132 = vld [vmem:[%s4 + $0x8] sm:$0xff]
    %v1133 = vld [vmem:[%s4 + $0x10] sm:$0xff]
    %v1134 = vld [vmem:[%s4 + $0x18] sm:$0xff]
    %v1135 = vld [vmem:[%s4 + $0x20] sm:$0xff]
    %v1136 = vld [vmem:[%s4 + $0x28] sm:$0xff]
    %v1137 = vld [vmem:[%s4 + $0x30] sm:$0xff]
    %v1138 = vld [vmem:[%s4 + $0x38] sm:$0xff]
    %v1139 = vld [vmem:[%s5] sm:$0x1]
    %v1141 = vlaneseq
    %v1142 = vshrl.u32 %v1141, 7
    %v1143 = vsub.s32 0, %v1142
    %v1144 = vrot.slane %v1139, %v1143
    %v1147 = vsel %vm247, %v1130, 0
    %1149 = vmatprep.subr.mxu0 0.0
    %1150 = vmatpush1.msra.mxu0 %v1131
    %1151 = vmatprep.subr.mxu0 0.0
    %1152 = vmatpush1.msra.mxu0 %v1132
    %1153 = vmatprep.subr.mxu0 0.0
    %1154 = vmatpush1.msra.mxu0 %v1133
    %1155 = vmatprep.subr.mxu0 0.0
    %1156 = vmatpush1.msra.mxu0 %v1134
    %1157 = vmatprep.subr.mxu0 0.0
    %1158 = vmatpush1.msra.mxu0 %v1135
    %1159 = vmatprep.subr.mxu0 0.0
    %1160 = vmatpush1.msra.mxu0 %v1136
    %1161 = vmatprep.subr.mxu0 0.0
    %1162 = vmatpush1.msra.mxu0 %v1137
    %1163 = vmatprep.subr.mxu0 0.0
    %1164 = vmatpush1.msra.mxu0 %v1138
    %1165 = vmatprep.subr.mxu0 0.0
    %1166 = vmatpush1.msra.mxu0 0.0
    %1167 = vmatprep.subr.mxu0 0.0
    %1168 = vmatpush1.msra.mxu0 0.0
    %1169 = vmatprep.subr.mxu0 0.0
    %1170 = vmatpush1.msra.mxu0 0.0
    %1171 = vmatprep.subr.mxu0 0.0
    %1172 = vmatpush1.msra.mxu0 0.0
    %1173 = vmatprep.subr.mxu0 0.0
    %1174 = vmatpush1.msra.mxu0 0.0
    %1175 = vmatprep.subr.mxu0 0.0
    %1176 = vmatpush1.msra.mxu0 0.0
    %1177 = vmatprep.subr.mxu0 0.0
    %1178 = vmatpush1.msra.mxu0 0.0
    %1179 = vmatprep.subr.mxu0 0.0
    %1180 = vmatpush1.msra.mxu0 0.0
    %1181 = vmatprep.subr.mxu0 0.0
    %1182 = vmatpush1.msra.mxu0 0.0
    %1183 = vmatprep.subr.mxu0 0.0
    %1184 = vmatpush1.msra.mxu0 0.0
    %1185 = vmatprep.subr.mxu0 0.0
    %1186 = vmatpush1.msra.mxu0 0.0
    %1187 = vmatprep.subr.mxu0 0.0
    %1188 = vmatpush1.msra.mxu0 0.0
    %1189 = vmatprep.subr.mxu0 0.0
    %1190 = vmatpush1.msra.mxu0 0.0
    %1191 = vmatprep.subr.mxu0 0.0
    %1192 = vmatpush1.msra.mxu0 0.0
    %1193 = vmatprep.subr.mxu0 0.0
    %1194 = vmatpush1.msra.mxu0 0.0
    %1195 = vmatprep.subr.mxu0 0.0
    %1196 = vmatpush1.msra.mxu0 0.0
    %1197 = vmatprep.subr.mxu0 0.0
    %1198 = vmatpush1.msra.mxu0 0.0
    %1199 = vmatprep.subr.mxu0 0.0
    %1200 = vmatpush1.msra.mxu0 0.0
    %1201 = vmatprep.subr.mxu0 0.0
    %1202 = vmatpush1.msra.mxu0 0.0
    %1203 = vmatprep.subr.mxu0 0.0
    %1204 = vmatpush1.msra.mxu0 0.0
    %1205 = vmatprep.subr.mxu0 0.0
    %1206 = vmatpush1.msra.mxu0 0.0
    %1207 = vmatprep.subr.mxu0 0.0
    %1208 = vmatpush1.msra.mxu0 0.0
    %1209 = vmatprep.subr.mxu0 0.0
    %1210 = vmatpush1.msra.mxu0 0.0
    %1211 = vmatprep.subr.mxu0 0.0
    %1212 = vmatpush1.msra.mxu0 0.0
    %1213 = vmatprep.mubr.f32.mxu0 0.0
    %1214 = vmatmul.mubr.f32.gmra.mrb[0].mxu0 %v1147
    %v1215 = vpop.f32.mrb[0].mxu0
    %v1216 = vadd.f32 %v1144, %v1215
    %v1217 = vpop.f32.mrb[0].mxu0
    %1218 = vdwg.mxu0
    %1219 = vst [vmem:[%s6] sm:$0xff] %v1216
    // Predicated region
    $region30: #{rnn_forward_prepared.1} parent=1 // pred_check
      _
    $region31: #{rnn_forward_prepared.1} parent=1 // pred_check_branch
      %1221 = sbr.rel (0) target = $region33
    $region32: #{rnn_forward_prepared.1} parent=1 // pred_region
      _
    $region33: #{rnn_forward_prepared.1} parent=1 // pred_fallthru
      _
    // Predicated region
    $region34: #{rnn_forward_prepared.1} parent=1 // pred_check
      _
    $region35: #{rnn_forward_prepared.1} parent=1 // pred_check_branch
      %1223 = sbr.rel (0) target = $region37
    $region36: #{rnn_forward_prepared.1} parent=1 // pred_region
      _
    $region37: #{rnn_forward_prepared.1} parent=1 // pred_fallthru
      _
    %1224 = vsyncpa [#allocation4], 1

</llo_original>
